<compile_context>
chip_gen: v7x
topology: tpu7x:2x2x1
jax: 0.10.0
libtpu: 0.0.40
codegen_flags: <defaults>
</compile_context>

<pallas_src>
import functools

import jax
import jax.numpy as jnp
from jax import lax
from jax.experimental import pallas as pl
from jax.experimental.pallas import tpu as pltpu


# ----------------------------- Pallas kernel ------------------------------- #

def _fused_encoder_kernel(x_ref, masks_ref, pool_ref,
                          w1_ref, b1_ref, w2_ref, b2_ref, fcw_ref, fcb_ref,
                          o_ref, *, img_w):
    """Entire encoder forward, transposed lane-dense layout.

    x_ref    : (Cp, N*H*W)   input, channels-first, flattened spatial on lanes
    masks_ref: (9, N*H*W)    0/1 validity mask per 3x3 tap ("same" padding)
    pool_ref : (N, N*H*W)    per-sample global-average-pool matrix (1/(H*W))
    w1_ref   : (C1, 9*Cp)    im2col conv1 weights (transposed)
    b1_ref   : (C1, 1)
    w2_ref   : (C2, 9*C1)
    b2_ref   : (C2, 1)
    fcw_ref  : (C2, D)
    fcb_ref  : (1, D)
    o_ref    : (N, D)        output features
    """
    nhw = x_ref.shape[1]
    # lane-tile aligned zero pad for the flat shifted slices (covers |shift|<=W+1)
    pad = ((img_w + 1 + 127) // 128) * 128

    masks = masks_ref[...]                                   # (9, nhw)

    def conv3x3_relu(xt, w_t, b_col):
        # xt: (c, nhw); w_t: (cout, 9*c); b_col: (cout, 1)
        c = xt.shape[0]
        zeros = jnp.zeros((c, pad), jnp.float32)
        xpad = jnp.concatenate([zeros, xt, zeros], axis=1)   # (c, nhw + 2*pad)
        taps = []
        for dy in range(3):
            for dx in range(3):
                t = dy * 3 + dx
                s = (dy - 1) * img_w + (dx - 1)
                # value at output flat index i is input at flat index i+s
                shifted = xpad[:, pad + s: pad + s + nhw]    # (c, nhw)
                taps.append(shifted * masks[t:t + 1, :])     # zero OOB taps
        patches = jnp.concatenate(taps, axis=0)              # (9*c, nhw)
        acc = jnp.dot(w_t, patches, preferred_element_type=jnp.float32)
        return jnp.maximum(acc + b_col, 0.0)                 # (cout, nhw)

    h1 = conv3x3_relu(x_ref[...], w1_ref[...], b1_ref[...])  # (C1, nhw)
    h2 = conv3x3_relu(h1, w2_ref[...], b2_ref[...])          # (C2, nhw)

    # Global average pool as an MXU matmul with a lane-dense (N, nhw) pool
    # matrix: contract the shared nhw (lane) axis of both operands (NT form,
    # same dimension numbers as flash-attention's q @ k^T).
    pooled = lax.dot_general(pool_ref[...], h2,
                             dimension_numbers=(((1,), (1,)), ((), ())),
                             preferred_element_type=jnp.float32)   # (N, C2)
    out = jnp.dot(pooled, fcw_ref[...],
                  preferred_element_type=jnp.float32)              # (N, D)
    o_ref[...] = (out + fcb_ref[...]).astype(o_ref.dtype)


# ------------------------------ JAX wrapper -------------------------------- #

_VMEM = pl.BlockSpec(memory_space=pltpu.MemorySpace.VMEM)


def _round_up(v, m):
    return ((v + m - 1) // m) * m


def encoder_forward(x_nchw, params):
    """Equivalent of Model.forward(x): returns encoder features (N, D)."""
    n, cin, h, w = x_nchw.shape
    c1 = params["conv1_w"].shape[-1]
    c2 = params["conv2_w"].shape[-1]
    d = params["fc_w"].shape[-1]
    hw = h * w
    nhw = n * hw
    cin_p = _round_up(cin, 8)          # sublane-align the im2col row blocks

    # ---- layout glue only (no hot-path compute) ----
    x_t = jnp.transpose(x_nchw.astype(jnp.float32), (1, 0, 2, 3)).reshape(cin, nhw)
    x_t = jnp.pad(x_t, ((0, cin_p - cin), (0, 0)))                    # (cin_p, nhw)

    w1 = jnp.pad(params["conv1_w"].astype(jnp.float32),
                 ((0, 0), (0, 0), (0, cin_p - cin), (0, 0)))          # (3,3,cin_p,c1)
    w1_t = w1.reshape(9 * cin_p, c1).T                                # (c1, 9*cin_p)
    w2_t = params["conv2_w"].astype(jnp.float32).reshape(9 * c1, c2).T  # (c2, 9*c1)
    fcw = params["fc_w"].astype(jnp.float32)                          # (c2, d)
    b1 = params["conv1_b"].astype(jnp.float32).reshape(c1, 1)
    b2 = params["conv2_b"].astype(jnp.float32).reshape(c2, 1)
    fcb = params["fc_b"].astype(jnp.float32).reshape(1, d)

    # constant tables: 3x3 "same"-padding validity masks and per-sample GAP matrix
    yy, xx = jnp.meshgrid(jnp.arange(h), jnp.arange(w), indexing="ij")
    mrows = []
    for dy in (-1, 0, 1):
        for dx in (-1, 0, 1):
            m = ((yy + dy >= 0) & (yy + dy < h) &
                 (xx + dx >= 0) & (xx + dx < w)).astype(jnp.float32)  # (h, w)
            mrows.append(jnp.tile(m.reshape(1, hw), (1, n)))          # (1, nhw)
    masks = jnp.concatenate(mrows, axis=0)                            # (9, nhw)
    # lane-dense (n, nhw) averaging matrix: row i has 1/hw over sample i's block
    pool = jnp.repeat(jnp.eye(n, dtype=jnp.float32), hw, axis=1) / float(hw)

    # advisory cost hint for the XLA scheduler around the custom call
    flops = (2 * nhw * (c1 * 9 * cin_p + c2 * 9 * c1)      # two im2col matmuls
             + 2 * n * c2 * nhw + 2 * n * c2 * d)          # GAP + FC matmuls
    bytes_accessed = 4 * (cin_p * nhw + 9 * nhw + n * nhw + c1 * 9 * cin_p + c1
                          + c2 * 9 * c1 + c2 + c2 * d + d + n * d)

    kernel = functools.partial(_fused_encoder_kernel, img_w=w)
    out = pl.pallas_call(
        kernel,
        out_shape=jax.ShapeDtypeStruct((n, d), jnp.float32),
        in_specs=[_VMEM] * 9,
        out_specs=_VMEM,
        cost_estimate=pl.CostEstimate(flops=flops, transcendentals=0,
                                      bytes_accessed=bytes_accessed),
    )(x_t, masks, pool, w1_t, b1, w2_t, b2, fcw, fcb)
    return out                                                        # (n, d)


model_forward = jax.jit(encoder_forward)


def init_params(key, cin=4, c1=8, c2=16, d=32):
    k1, k2, k3 = jax.random.split(key, 3)
    return {
        "conv1_w": jax.random.normal(k1, (3, 3, cin, c1), jnp.float32) * 0.1,
        "conv1_b": jnp.zeros((c1,), jnp.float32),
        "conv2_w": jax.random.normal(k2, (3, 3, c1, c2), jnp.float32) * 0.1,
        "conv2_b": jnp.zeros((c2,), jnp.float32),
        "fc_w": jax.random.normal(k3, (c2, d), jnp.float32) * 0.1,
        "fc_b": jnp.zeros((d,), jnp.float32),
    }


# ------------------------------- reference --------------------------------- #

def _reference_forward(x_nchw, params):
    x = jnp.transpose(x_nchw, (0, 2, 3, 1)).astype(jnp.float32)

    def conv(xin, wgt, b):
        y = jax.lax.conv_general_dilated(
            xin, wgt, window_strides=(1, 1), padding="SAME",
            dimension_numbers=("NHWC", "HWIO", "NHWC"))
        return jnp.maximum(y + b, 0.0)

    h1 = conv(x, params["conv1_w"], params["conv1_b"])
    h2 = conv(h1, params["conv2_w"], params["conv2_b"])
    pooled = jnp.mean(h2, axis=(1, 2))
    return pooled @ params["fc_w"] + params["fc_b"]


if __name__ == "__main__":
    key = jax.random.PRNGKey(0)
    kx, kp = jax.random.split(key)
    # small shapes consistent with an image-encoder forward: batch=2, C=4, 16x16
    x = jax.random.normal(kx, (2, 4, 16, 16), jnp.float32)
    params = init_params(kp)

    out = model_forward(x, params)
    out = jax.block_until_ready(out)

    ref = _reference_forward(x, params)
    assert out.shape == (2, 32), out.shape
    assert jnp.allclose(out, ref, atol=1e-3, rtol=1e-3), "mismatch vs reference"

    print("KERNEL_OK")
</pallas_src>

<mosaic_0001>
module attributes {stable_mosaic.version = 11 : i64} {
  func.func @_fused_encoder_kernel(%arg0: memref<8x512xf32, #tpu.memory_space<vmem>>, %arg1: memref<9x512xf32, #tpu.memory_space<vmem>>, %arg2: memref<2x512xf32, #tpu.memory_space<vmem>>, %arg3: memref<8x72xf32, #tpu.memory_space<vmem>>, %arg4: memref<8x1xf32, #tpu.memory_space<vmem>>, %arg5: memref<16x72xf32, #tpu.memory_space<vmem>>, %arg6: memref<16x1xf32, #tpu.memory_space<vmem>>, %arg7: memref<16x32xf32, #tpu.memory_space<vmem>>, %arg8: memref<1x32xf32, #tpu.memory_space<vmem>>, %arg9: memref<2x32xf32, #tpu.memory_space<vmem>>) attributes {dimension_semantics = [], scalar_prefetch = 0 : i64, scratch_operands = 0 : i64, tpu.core_type = #tpu.core_type<tc>} {
    %c0 = arith.constant 0 : index
    %c0_0 = arith.constant 0 : index
    %0 = vector.load %arg1[%c0, %c0_0] : memref<9x512xf32, #tpu.memory_space<vmem>>, vector<9x512xf32>
    %c0_1 = arith.constant 0 : index
    %c0_2 = arith.constant 0 : index
    %1 = vector.load %arg0[%c0_1, %c0_2] : memref<8x512xf32, #tpu.memory_space<vmem>>, vector<8x512xf32>
    %c0_3 = arith.constant 0 : index
    %c0_4 = arith.constant 0 : index
    %2 = vector.load %arg3[%c0_3, %c0_4] : memref<8x72xf32, #tpu.memory_space<vmem>>, vector<8x72xf32>
    %c0_5 = arith.constant 0 : index
    %c0_6 = arith.constant 0 : index
    %3 = vector.load %arg4[%c0_5, %c0_6] : memref<8x1xf32, #tpu.memory_space<vmem>>, vector<8x1xf32>
    %cst = arith.constant 0.000000e+00 : f32
    %4 = vector.broadcast %cst : f32 to vector<8x128xf32>
    %5 = tpu.concatenate %4, %1, %4 in 1 : vector<8x128xf32>, vector<8x512xf32>, vector<8x128xf32> -> vector<8x768xf32>
    %6 = vector.extract_strided_slice %5 {offsets = [0, 111], sizes = [8, 512], strides = [1, 1]} : vector<8x768xf32> to vector<8x512xf32>
    %7 = vector.extract_strided_slice %0 {offsets = [0, 0], sizes = [1, 512], strides = [1, 1]} : vector<9x512xf32> to vector<1x512xf32>
    %8 = vector.broadcast %7 : vector<1x512xf32> to vector<8x512xf32>
    %9 = arith.mulf %6, %8 : vector<8x512xf32>
    %10 = vector.extract_strided_slice %5 {offsets = [0, 112], sizes = [8, 512], strides = [1, 1]} : vector<8x768xf32> to vector<8x512xf32>
    %11 = vector.extract_strided_slice %0 {offsets = [1, 0], sizes = [1, 512], strides = [1, 1]} : vector<9x512xf32> to vector<1x512xf32>
    %12 = vector.broadcast %11 : vector<1x512xf32> to vector<8x512xf32>
    %13 = arith.mulf %10, %12 : vector<8x512xf32>
    %14 = vector.extract_strided_slice %5 {offsets = [0, 113], sizes = [8, 512], strides = [1, 1]} : vector<8x768xf32> to vector<8x512xf32>
    %15 = vector.extract_strided_slice %0 {offsets = [2, 0], sizes = [1, 512], strides = [1, 1]} : vector<9x512xf32> to vector<1x512xf32>
    %16 = vector.broadcast %15 : vector<1x512xf32> to vector<8x512xf32>
    %17 = arith.mulf %14, %16 : vector<8x512xf32>
    %18 = vector.extract_strided_slice %5 {offsets = [0, 127], sizes = [8, 512], strides = [1, 1]} : vector<8x768xf32> to vector<8x512xf32>
    %19 = vector.extract_strided_slice %0 {offsets = [3, 0], sizes = [1, 512], strides = [1, 1]} : vector<9x512xf32> to vector<1x512xf32>
    %20 = vector.broadcast %19 : vector<1x512xf32> to vector<8x512xf32>
    %21 = arith.mulf %18, %20 : vector<8x512xf32>
    %22 = vector.extract_strided_slice %5 {offsets = [0, 128], sizes = [8, 512], strides = [1, 1]} : vector<8x768xf32> to vector<8x512xf32>
    %23 = vector.extract_strided_slice %0 {offsets = [4, 0], sizes = [1, 512], strides = [1, 1]} : vector<9x512xf32> to vector<1x512xf32>
    %24 = vector.broadcast %23 : vector<1x512xf32> to vector<8x512xf32>
    %25 = arith.mulf %22, %24 : vector<8x512xf32>
    %26 = vector.extract_strided_slice %5 {offsets = [0, 129], sizes = [8, 512], strides = [1, 1]} : vector<8x768xf32> to vector<8x512xf32>
    %27 = vector.extract_strided_slice %0 {offsets = [5, 0], sizes = [1, 512], strides = [1, 1]} : vector<9x512xf32> to vector<1x512xf32>
    %28 = vector.broadcast %27 : vector<1x512xf32> to vector<8x512xf32>
    %29 = arith.mulf %26, %28 : vector<8x512xf32>
    %30 = vector.extract_strided_slice %5 {offsets = [0, 143], sizes = [8, 512], strides = [1, 1]} : vector<8x768xf32> to vector<8x512xf32>
    %31 = vector.extract_strided_slice %0 {offsets = [6, 0], sizes = [1, 512], strides = [1, 1]} : vector<9x512xf32> to vector<1x512xf32>
    %32 = vector.broadcast %31 : vector<1x512xf32> to vector<8x512xf32>
    %33 = arith.mulf %30, %32 : vector<8x512xf32>
    %34 = vector.extract_strided_slice %5 {offsets = [0, 144], sizes = [8, 512], strides = [1, 1]} : vector<8x768xf32> to vector<8x512xf32>
    %35 = vector.extract_strided_slice %0 {offsets = [7, 0], sizes = [1, 512], strides = [1, 1]} : vector<9x512xf32> to vector<1x512xf32>
    %36 = vector.broadcast %35 : vector<1x512xf32> to vector<8x512xf32>
    %37 = arith.mulf %34, %36 : vector<8x512xf32>
    %38 = vector.extract_strided_slice %5 {offsets = [0, 145], sizes = [8, 512], strides = [1, 1]} : vector<8x768xf32> to vector<8x512xf32>
    %39 = vector.extract_strided_slice %0 {offsets = [8, 0], sizes = [1, 512], strides = [1, 1]} : vector<9x512xf32> to vector<1x512xf32>
    %40 = vector.broadcast %39 : vector<1x512xf32> to vector<8x512xf32>
    %41 = arith.mulf %38, %40 : vector<8x512xf32>
    %42 = tpu.concatenate %9, %13, %17, %21, %25, %29, %33, %37, %41 in 0 : vector<8x512xf32>, vector<8x512xf32>, vector<8x512xf32>, vector<8x512xf32>, vector<8x512xf32>, vector<8x512xf32>, vector<8x512xf32>, vector<8x512xf32>, vector<8x512xf32> -> vector<72x512xf32>
    %cst_7 = arith.constant dense<0.000000e+00> : vector<8x512xf32>
    %43 = tpu.matmul %2, %42, %cst_7 {dimension_numbers = #tpu.dot_dimension_numbers<[1], [0], [0], [1], [0, 0, 1, 1], [], []>} : vector<8x72xf32>, vector<72x512xf32>, vector<8x512xf32> -> vector<8x512xf32>
    %44 = vector.broadcast %3 : vector<8x1xf32> to vector<8x512xf32>
    %45 = arith.addf %43, %44 : vector<8x512xf32>
    %cst_8 = arith.constant 0.000000e+00 : f32
    %46 = vector.broadcast %cst_8 : f32 to vector<8x512xf32>
    %47 = arith.maximumf %45, %46 : vector<8x512xf32>
    %c0_9 = arith.constant 0 : index
    %c0_10 = arith.constant 0 : index
    %48 = vector.load %arg5[%c0_9, %c0_10] : memref<16x72xf32, #tpu.memory_space<vmem>>, vector<16x72xf32>
    %c0_11 = arith.constant 0 : index
    %c0_12 = arith.constant 0 : index
    %49 = vector.load %arg6[%c0_11, %c0_12] : memref<16x1xf32, #tpu.memory_space<vmem>>, vector<16x1xf32>
    %cst_13 = arith.constant 0.000000e+00 : f32
    %50 = vector.broadcast %cst_13 : f32 to vector<8x128xf32>
    %51 = tpu.concatenate %50, %47, %50 in 1 : vector<8x128xf32>, vector<8x512xf32>, vector<8x128xf32> -> vector<8x768xf32>
    %52 = vector.extract_strided_slice %51 {offsets = [0, 111], sizes = [8, 512], strides = [1, 1]} : vector<8x768xf32> to vector<8x512xf32>
    %53 = vector.extract_strided_slice %0 {offsets = [0, 0], sizes = [1, 512], strides = [1, 1]} : vector<9x512xf32> to vector<1x512xf32>
    %54 = vector.broadcast %53 : vector<1x512xf32> to vector<8x512xf32>
    %55 = arith.mulf %52, %54 : vector<8x512xf32>
    %56 = vector.extract_strided_slice %51 {offsets = [0, 112], sizes = [8, 512], strides = [1, 1]} : vector<8x768xf32> to vector<8x512xf32>
    %57 = vector.extract_strided_slice %0 {offsets = [1, 0], sizes = [1, 512], strides = [1, 1]} : vector<9x512xf32> to vector<1x512xf32>
    %58 = vector.broadcast %57 : vector<1x512xf32> to vector<8x512xf32>
    %59 = arith.mulf %56, %58 : vector<8x512xf32>
    %60 = vector.extract_strided_slice %51 {offsets = [0, 113], sizes = [8, 512], strides = [1, 1]} : vector<8x768xf32> to vector<8x512xf32>
    %61 = vector.extract_strided_slice %0 {offsets = [2, 0], sizes = [1, 512], strides = [1, 1]} : vector<9x512xf32> to vector<1x512xf32>
    %62 = vector.broadcast %61 : vector<1x512xf32> to vector<8x512xf32>
    %63 = arith.mulf %60, %62 : vector<8x512xf32>
    %64 = vector.extract_strided_slice %51 {offsets = [0, 127], sizes = [8, 512], strides = [1, 1]} : vector<8x768xf32> to vector<8x512xf32>
    %65 = vector.extract_strided_slice %0 {offsets = [3, 0], sizes = [1, 512], strides = [1, 1]} : vector<9x512xf32> to vector<1x512xf32>
    %66 = vector.broadcast %65 : vector<1x512xf32> to vector<8x512xf32>
    %67 = arith.mulf %64, %66 : vector<8x512xf32>
    %68 = vector.extract_strided_slice %51 {offsets = [0, 128], sizes = [8, 512], strides = [1, 1]} : vector<8x768xf32> to vector<8x512xf32>
    %69 = vector.extract_strided_slice %0 {offsets = [4, 0], sizes = [1, 512], strides = [1, 1]} : vector<9x512xf32> to vector<1x512xf32>
    %70 = vector.broadcast %69 : vector<1x512xf32> to vector<8x512xf32>
    %71 = arith.mulf %68, %70 : vector<8x512xf32>
    %72 = vector.extract_strided_slice %51 {offsets = [0, 129], sizes = [8, 512], strides = [1, 1]} : vector<8x768xf32> to vector<8x512xf32>
    %73 = vector.extract_strided_slice %0 {offsets = [5, 0], sizes = [1, 512], strides = [1, 1]} : vector<9x512xf32> to vector<1x512xf32>
    %74 = vector.broadcast %73 : vector<1x512xf32> to vector<8x512xf32>
    %75 = arith.mulf %72, %74 : vector<8x512xf32>
    %76 = vector.extract_strided_slice %51 {offsets = [0, 143], sizes = [8, 512], strides = [1, 1]} : vector<8x768xf32> to vector<8x512xf32>
    %77 = vector.extract_strided_slice %0 {offsets = [6, 0], sizes = [1, 512], strides = [1, 1]} : vector<9x512xf32> to vector<1x512xf32>
    %78 = vector.broadcast %77 : vector<1x512xf32> to vector<8x512xf32>
    %79 = arith.mulf %76, %78 : vector<8x512xf32>
    %80 = vector.extract_strided_slice %51 {offsets = [0, 144], sizes = [8, 512], strides = [1, 1]} : vector<8x768xf32> to vector<8x512xf32>
    %81 = vector.extract_strided_slice %0 {offsets = [7, 0], sizes = [1, 512], strides = [1, 1]} : vector<9x512xf32> to vector<1x512xf32>
    %82 = vector.broadcast %81 : vector<1x512xf32> to vector<8x512xf32>
    %83 = arith.mulf %80, %82 : vector<8x512xf32>
    %84 = vector.extract_strided_slice %51 {offsets = [0, 145], sizes = [8, 512], strides = [1, 1]} : vector<8x768xf32> to vector<8x512xf32>
    %85 = vector.extract_strided_slice %0 {offsets = [8, 0], sizes = [1, 512], strides = [1, 1]} : vector<9x512xf32> to vector<1x512xf32>
    %86 = vector.broadcast %85 : vector<1x512xf32> to vector<8x512xf32>
    %87 = arith.mulf %84, %86 : vector<8x512xf32>
    %88 = tpu.concatenate %55, %59, %63, %67, %71, %75, %79, %83, %87 in 0 : vector<8x512xf32>, vector<8x512xf32>, vector<8x512xf32>, vector<8x512xf32>, vector<8x512xf32>, vector<8x512xf32>, vector<8x512xf32>, vector<8x512xf32>, vector<8x512xf32> -> vector<72x512xf32>
    %cst_14 = arith.constant dense<0.000000e+00> : vector<16x512xf32>
    %89 = tpu.matmul %48, %88, %cst_14 {dimension_numbers = #tpu.dot_dimension_numbers<[1], [0], [0], [1], [0, 0, 1, 1], [], []>} : vector<16x72xf32>, vector<72x512xf32>, vector<16x512xf32> -> vector<16x512xf32>
    %90 = vector.broadcast %49 : vector<16x1xf32> to vector<16x512xf32>
    %91 = arith.addf %89, %90 : vector<16x512xf32>
    %cst_15 = arith.constant 0.000000e+00 : f32
    %92 = vector.broadcast %cst_15 : f32 to vector<16x512xf32>
    %93 = arith.maximumf %91, %92 : vector<16x512xf32>
    %c0_16 = arith.constant 0 : index
    %c0_17 = arith.constant 0 : index
    %94 = vector.load %arg2[%c0_16, %c0_17] : memref<2x512xf32, #tpu.memory_space<vmem>>, vector<2x512xf32>
    %cst_18 = arith.constant dense<0.000000e+00> : vector<2x16xf32>
    %95 = tpu.matmul %94, %93, %cst_18 {dimension_numbers = #tpu.dot_dimension_numbers<[1], [1], [0], [0], [0, 0, 1, 0], [], []>} : vector<2x512xf32>, vector<16x512xf32>, vector<2x16xf32> -> vector<2x16xf32>
    %c0_19 = arith.constant 0 : index
    %c0_20 = arith.constant 0 : index
    %96 = vector.load %arg7[%c0_19, %c0_20] : memref<16x32xf32, #tpu.memory_space<vmem>>, vector<16x32xf32>
    %cst_21 = arith.constant dense<0.000000e+00> : vector<2x32xf32>
    %97 = tpu.matmul %95, %96, %cst_21 {dimension_numbers = #tpu.dot_dimension_numbers<[1], [0], [0], [1], [0, 0, 1, 1], [], []>} : vector<2x16xf32>, vector<16x32xf32>, vector<2x32xf32> -> vector<2x32xf32>
    %c0_22 = arith.constant 0 : index
    %c0_23 = arith.constant 0 : index
    %98 = vector.load %arg8[%c0_22, %c0_23] : memref<1x32xf32, #tpu.memory_space<vmem>>, vector<1x32xf32>
    %99 = vector.broadcast %98 : vector<1x32xf32> to vector<2x32xf32>
    %100 = arith.addf %97, %99 : vector<2x32xf32>
    %c0_24 = arith.constant 0 : index
    %c0_25 = arith.constant 0 : index
    %101 = vector.load %arg9[%c0_24, %c0_25] : memref<2x32xf32, #tpu.memory_space<vmem>>, vector<2x32xf32>
    tpu.vector_store %arg9[%c0_24, %c0_25], %100 {strides = array<i32>} : memref<2x32xf32, #tpu.memory_space<vmem>>, vector<2x32xf32>,
    return
  }
}

</mosaic_0001>

<llo_original>
// kernel: encoder_forward.1
$region0: #{encoder_forward.1}
  #allocation0 [shape = 'u32[]', space=smem, size = 0x4, offset = 0x4, fixed_abs, tag = 'smem constant byte address 0x4 - core index']
  #allocation1 [shape = 'u32[144,128]{1,0:T(1,128)}', space=vmem, size = 0x12000, scoped, tag = 'internal scratch']
  %s0 = inlined_call_operand.vmem [shape: f32[8,512], index: 0, kind: input, shape index: {}]
  %s1 = inlined_call_operand.vmem [shape: f32[9,512], index: 1, kind: input, shape index: {}]
  %s2 = inlined_call_operand.vmem [shape: f32[2,512], index: 2, kind: input, shape index: {}]
  %s3 = inlined_call_operand.vmem [shape: f32[8,72], index: 3, kind: input, shape index: {}]
  %s4 = inlined_call_operand.vmem [shape: f32[8,1], index: 4, kind: input, shape index: {}]
  %s5 = inlined_call_operand.vmem [shape: f32[16,72], index: 5, kind: input, shape index: {}]
  %s6 = inlined_call_operand.vmem [shape: f32[16,1], index: 6, kind: input, shape index: {}]
  %s7 = inlined_call_operand.vmem [shape: f32[16,32], index: 7, kind: input, shape index: {}]
  %s8 = inlined_call_operand.vmem [shape: f32[1,32], index: 8, kind: input, shape index: {}]
  %s9 = inlined_call_operand.hbm [shape: f32[2,32], index: 9, kind: output, shape index: {}]
  %s10 = sld [smem:[#allocation0]]
  $region46: #{encoder_forward.1} parent=0
    _
  %s12 = ssub.s32 1, %s10
  %s13 = scalar_select 0, %s12, %s10
  $region1: #{encoder_forward.1} parent=0
    #allocation2 [shape = 'u8[1024]{0}', space=vmem, size = 0x400, scoped, tag = 'output window, operand 0, single buffered']
    #allocation3 [shape = 's32[1]{0}', space=sflag, size = 0x4, scoped, tag = 'scoped memory for encoder_forward.1']
    %14 = vsyncpa [#allocation3], 0
    // Predicated region
    $region2: #{encoder_forward.1} parent=1 // pred_check
      _
    $region3: #{encoder_forward.1} parent=1 // pred_check_branch
      %16 = sbr.rel (0) target = $region5
    $region4: #{encoder_forward.1} parent=1 // pred_region
      _
    $region5: #{encoder_forward.1} parent=1 // pred_fallthru
      _
    // Predicated region
    $region6: #{encoder_forward.1} parent=1 // pred_check
      _
    $region7: #{encoder_forward.1} parent=1 // pred_check_branch
      %18 = sbr.rel (0) target = $region9
    $region8: #{encoder_forward.1} parent=1 // pred_region
      _
    $region9: #{encoder_forward.1} parent=1 // pred_fallthru
      _
    // Predicated region
    $region10: #{encoder_forward.1} parent=1 // pred_check
      _
    $region11: #{encoder_forward.1} parent=1 // pred_check_branch
      %20 = sbr.rel (0) target = $region13
    $region12: #{encoder_forward.1} parent=1 // pred_region
      _
    $region13: #{encoder_forward.1} parent=1 // pred_fallthru
      _
    // Predicated region
    $region14: #{encoder_forward.1} parent=1 // pred_check
      _
    $region15: #{encoder_forward.1} parent=1 // pred_check_branch
      %22 = sbr.rel (0) target = $region17
    $region16: #{encoder_forward.1} parent=1 // pred_region
      _
    $region17: #{encoder_forward.1} parent=1 // pred_fallthru
      _
    // Predicated region
    $region18: #{encoder_forward.1} parent=1 // pred_check
      _
    $region19: #{encoder_forward.1} parent=1 // pred_check_branch
      %24 = sbr.rel (0) target = $region21
    $region20: #{encoder_forward.1} parent=1 // pred_region
      _
    $region21: #{encoder_forward.1} parent=1 // pred_fallthru
      _
    // Predicated region
    $region22: #{encoder_forward.1} parent=1 // pred_check
      _
    $region23: #{encoder_forward.1} parent=1 // pred_check_branch
      %26 = sbr.rel (0) target = $region25
    $region24: #{encoder_forward.1} parent=1 // pred_region
      _
    $region25: #{encoder_forward.1} parent=1 // pred_fallthru
      _
    // Predicated region
    $region26: #{encoder_forward.1} parent=1 // pred_check
      _
    $region27: #{encoder_forward.1} parent=1 // pred_check_branch
      %28 = sbr.rel (0) target = $region29
    $region28: #{encoder_forward.1} parent=1 // pred_region
      _
    $region29: #{encoder_forward.1} parent=1 // pred_fallthru
      _
    // Predicated region
    $region30: #{encoder_forward.1} parent=1 // pred_check
      _
    $region31: #{encoder_forward.1} parent=1 // pred_check_branch
      %30 = sbr.rel (0) target = $region33
    $region32: #{encoder_forward.1} parent=1 // pred_region
      _
    $region33: #{encoder_forward.1} parent=1 // pred_fallthru
      _
    // Predicated region
    $region34: #{encoder_forward.1} parent=1 // pred_check
      _
    $region35: #{encoder_forward.1} parent=1 // pred_check_branch
      %32 = sbr.rel (0) target = $region37
    $region36: #{encoder_forward.1} parent=1 // pred_region
      _
    $region37: #{encoder_forward.1} parent=1 // pred_fallthru
      _
    %v33 = vld [vmem:[%s1] sm:$0xff]
    %v34 = vld [vmem:[%s1 + $0x8] sm:$0xff]
    %v35 = vld [vmem:[%s1 + $0x10] sm:$0xff]
    %v36 = vld [vmem:[%s1 + $0x18] sm:$0xff]
    %v37 = vld [vmem:[%s1 + $0x20] sm:$0x1]
    %v38 = vld [vmem:[%s1 + $0x28] sm:$0x1]
    %v39 = vld [vmem:[%s1 + $0x30] sm:$0x1]
    %v40 = vld [vmem:[%s1 + $0x38] sm:$0x1]
    %v41 = vld [vmem:[%s0] sm:$0xff]
    %v42 = vld [vmem:[%s0 + $0x8] sm:$0xff]
    %v43 = vld [vmem:[%s0 + $0x10] sm:$0xff]
    %v44 = vld [vmem:[%s0 + $0x18] sm:$0xff]
    %v45 = vld [vmem:[%s3] sm:$0xff]
    %v46 = vld [vmem:[%s4] sm:$0xff]
    %v47 = vlaneseq
    %v48 = vshrl.u32 %v47, 7
    %v49 = vsub.s32 0, %v48
    %v50 = vrot.slane %v33, %v49
    %v51 = vlaneseq
    %v52 = vshrl.u32 %v51, 7
    %v53 = vsub.s32 0, %v52
    %v54 = vrot.slane %v34, %v53
    %v55 = vlaneseq
    %v56 = vshrl.u32 %v55, 7
    %v57 = vsub.s32 0, %v56
    %v58 = vrot.slane %v35, %v57
    %v59 = vlaneseq
    %v60 = vshrl.u32 %v59, 7
    %v61 = vsub.s32 0, %v60
    %v62 = vrot.slane %v36, %v61
    %67 = vrot.lane.b32.xlu0 %v50, 111
    %v68 = vpop.permute.xlu0 %67
    %69 = vrot.lane.b32.xlu0 %v54, 111
    %v70 = vpop.permute.xlu0 %69
    %71 = vrot.lane.b32.xlu0 %v58, 111
    %v72 = vpop.permute.xlu0 %71
    %73 = vrot.lane.b32.xlu0 %v62, 111
    %v74 = vpop.permute.xlu0 %73
    %vm75 = vcmask 908288
    %v76 = vsel %vm75, %v68, %v70
    %v77 = vsel %vm75, %v70, %v72
    %v78 = vsel %vm75, %v72, %v74
    %v84 = vmul.f32 %v68, 0.0
    %v85 = vmul.f32 %v41, %v76
    %v86 = vmul.f32 %v42, %v77
    %v87 = vmul.f32 %v43, %v78
    %v88 = vmul.f32 %v44, %v74
    %v89 = vlaneseq
    %v90 = vshrl.u32 %v89, 7
    %v91 = vsub.s32 1, %v90
    %v92 = vrot.slane %v33, %v91
    %v93 = vlaneseq
    %v94 = vshrl.u32 %v93, 7
    %v95 = vsub.s32 1, %v94
    %v96 = vrot.slane %v34, %v95
    %v97 = vlaneseq
    %v98 = vshrl.u32 %v97, 7
    %v99 = vsub.s32 1, %v98
    %v100 = vrot.slane %v35, %v99
    %v101 = vlaneseq
    %v102 = vshrl.u32 %v101, 7
    %v103 = vsub.s32 1, %v102
    %v104 = vrot.slane %v36, %v103
    %109 = vrot.lane.b32.xlu0 %v92, 112
    %v110 = vpop.permute.xlu0 %109
    %111 = vrot.lane.b32.xlu0 %v96, 112
    %v112 = vpop.permute.xlu0 %111
    %113 = vrot.lane.b32.xlu0 %v100, 112
    %v114 = vpop.permute.xlu0 %113
    %115 = vrot.lane.b32.xlu0 %v104, 112
    %v116 = vpop.permute.xlu0 %115
    %vm117 = vcmask 916480
    %v118 = vsel %vm117, %v110, %v112
    %v119 = vsel %vm117, %v112, %v114
    %v120 = vsel %vm117, %v114, %v116
    %v126 = vmul.f32 %v110, 0.0
    %v127 = vmul.f32 %v41, %v118
    %v128 = vmul.f32 %v42, %v119
    %v129 = vmul.f32 %v43, %v120
    %v130 = vmul.f32 %v44, %v116
    %v131 = vlaneseq
    %v132 = vshrl.u32 %v131, 7
    %v133 = vsub.s32 2, %v132
    %v134 = vrot.slane %v33, %v133
    %v135 = vlaneseq
    %v136 = vshrl.u32 %v135, 7
    %v137 = vsub.s32 2, %v136
    %v138 = vrot.slane %v34, %v137
    %v139 = vlaneseq
    %v140 = vshrl.u32 %v139, 7
    %v141 = vsub.s32 2, %v140
    %v142 = vrot.slane %v35, %v141
    %v143 = vlaneseq
    %v144 = vshrl.u32 %v143, 7
    %v145 = vsub.s32 2, %v144
    %v146 = vrot.slane %v36, %v145
    %151 = vrot.lane.b32.xlu0 %v134, 113
    %v152 = vpop.permute.xlu0 %151
    %153 = vrot.lane.b32.xlu0 %v138, 113
    %v154 = vpop.permute.xlu0 %153
    %155 = vrot.lane.b32.xlu0 %v142, 113
    %v156 = vpop.permute.xlu0 %155
    %157 = vrot.lane.b32.xlu0 %v146, 113
    %v158 = vpop.permute.xlu0 %157
    %vm159 = vcmask 924672
    %v160 = vsel %vm159, %v152, %v154
    %v161 = vsel %vm159, %v154, %v156
    %v162 = vsel %vm159, %v156, %v158
    %v168 = vmul.f32 %v152, 0.0
    %v169 = vmul.f32 %v41, %v160
    %v170 = vmul.f32 %v42, %v161
    %v171 = vmul.f32 %v43, %v162
    %v172 = vmul.f32 %v44, %v158
    %v173 = vlaneseq
    %v174 = vshrl.u32 %v173, 7
    %v175 = vsub.s32 3, %v174
    %v176 = vrot.slane %v33, %v175
    %v177 = vlaneseq
    %v178 = vshrl.u32 %v177, 7
    %v179 = vsub.s32 3, %v178
    %v180 = vrot.slane %v34, %v179
    %v181 = vlaneseq
    %v182 = vshrl.u32 %v181, 7
    %v183 = vsub.s32 3, %v182
    %v184 = vrot.slane %v35, %v183
    %v185 = vlaneseq
    %v186 = vshrl.u32 %v185, 7
    %v187 = vsub.s32 3, %v186
    %v188 = vrot.slane %v36, %v187
    %193 = vrot.lane.b32.xlu0 %v176, 127
    %v194 = vpop.permute.xlu0 %193
    %195 = vrot.lane.b32.xlu0 %v180, 127
    %v196 = vpop.permute.xlu0 %195
    %197 = vrot.lane.b32.xlu0 %v184, 127
    %v198 = vpop.permute.xlu0 %197
    %199 = vrot.lane.b32.xlu0 %v188, 127
    %v200 = vpop.permute.xlu0 %199
    %vm201 = vcmask 1039360
    %v202 = vsel %vm201, %v194, %v196
    %v203 = vsel %vm201, %v196, %v198
    %v204 = vsel %vm201, %v198, %v200
    %v210 = vmul.f32 %v194, 0.0
    %v211 = vmul.f32 %v41, %v202
    %v212 = vmul.f32 %v42, %v203
    %v213 = vmul.f32 %v43, %v204
    %v214 = vmul.f32 %v44, %v200
    %v215 = vlaneseq
    %v216 = vshrl.u32 %v215, 7
    %v217 = vsub.s32 4, %v216
    %v218 = vrot.slane %v33, %v217
    %v219 = vlaneseq
    %v220 = vshrl.u32 %v219, 7
    %v221 = vsub.s32 4, %v220
    %v222 = vrot.slane %v34, %v221
    %v223 = vlaneseq
    %v224 = vshrl.u32 %v223, 7
    %v225 = vsub.s32 4, %v224
    %v226 = vrot.slane %v35, %v225
    %v227 = vlaneseq
    %v228 = vshrl.u32 %v227, 7
    %v229 = vsub.s32 4, %v228
    %v230 = vrot.slane %v36, %v229
    %v231 = vmul.f32 %v41, %v218
    %v232 = vmul.f32 %v42, %v222
    %v233 = vmul.f32 %v43, %v226
    %v234 = vmul.f32 %v44, %v230
    %v235 = vlaneseq
    %v236 = vshrl.u32 %v235, 7
    %v237 = vsub.s32 5, %v236
    %v238 = vrot.slane %v33, %v237
    %v239 = vlaneseq
    %v240 = vshrl.u32 %v239, 7
    %v241 = vsub.s32 5, %v240
    %v242 = vrot.slane %v34, %v241
    %v243 = vlaneseq
    %v244 = vshrl.u32 %v243, 7
    %v245 = vsub.s32 5, %v244
    %v246 = vrot.slane %v35, %v245
    %v247 = vlaneseq
    %v248 = vshrl.u32 %v247, 7
    %v249 = vsub.s32 5, %v248
    %v250 = vrot.slane %v36, %v249
    %255 = vrot.lane.b32.xlu0 %v238, 1
    %v256 = vpop.permute.xlu0 %255
    %257 = vrot.lane.b32.xlu0 %v242, 1
    %v258 = vpop.permute.xlu0 %257
    %259 = vrot.lane.b32.xlu0 %v246, 1
    %v260 = vpop.permute.xlu0 %259
    %261 = vrot.lane.b32.xlu0 %v250, 1
    %v262 = vpop.permute.xlu0 %261
    %vm263 = vcmask 7168
    %v264 = vsel %vm263, %v256, %v258
    %v265 = vsel %vm263, %v258, %v260
    %v266 = vsel %vm263, %v260, %v262
    %v272 = vmul.f32 %v41, %v256
    %v273 = vmul.f32 %v42, %v264
    %v274 = vmul.f32 %v43, %v265
    %v275 = vmul.f32 %v44, %v266
    %v276 = vmul.f32 %v262, 0.0
    %v277 = vlaneseq
    %v278 = vshrl.u32 %v277, 7
    %v279 = vsub.s32 6, %v278
    %v280 = vrot.slane %v33, %v279
    %v281 = vlaneseq
    %v282 = vshrl.u32 %v281, 7
    %v283 = vsub.s32 6, %v282
    %v284 = vrot.slane %v34, %v283
    %v285 = vlaneseq
    %v286 = vshrl.u32 %v285, 7
    %v287 = vsub.s32 6, %v286
    %v288 = vrot.slane %v35, %v287
    %v289 = vlaneseq
    %v290 = vshrl.u32 %v289, 7
    %v291 = vsub.s32 6, %v290
    %v292 = vrot.slane %v36, %v291
    %297 = vrot.lane.b32.xlu0 %v280, 15
    %v298 = vpop.permute.xlu0 %297
    %299 = vrot.lane.b32.xlu0 %v284, 15
    %v300 = vpop.permute.xlu0 %299
    %301 = vrot.lane.b32.xlu0 %v288, 15
    %v302 = vpop.permute.xlu0 %301
    %303 = vrot.lane.b32.xlu0 %v292, 15
    %v304 = vpop.permute.xlu0 %303
    %vm305 = vcmask 121856
    %v306 = vsel %vm305, %v298, %v300
    %v307 = vsel %vm305, %v300, %v302
    %v308 = vsel %vm305, %v302, %v304
    %v314 = vmul.f32 %v41, %v298
    %v315 = vmul.f32 %v42, %v306
    %v316 = vmul.f32 %v43, %v307
    %v317 = vmul.f32 %v44, %v308
    %v318 = vmul.f32 %v304, 0.0
    %v319 = vlaneseq
    %v320 = vshrl.u32 %v319, 7
    %v321 = vsub.s32 7, %v320
    %v322 = vrot.slane %v33, %v321
    %v323 = vlaneseq
    %v324 = vshrl.u32 %v323, 7
    %v325 = vsub.s32 7, %v324
    %v326 = vrot.slane %v34, %v325
    %v327 = vlaneseq
    %v328 = vshrl.u32 %v327, 7
    %v329 = vsub.s32 7, %v328
    %v330 = vrot.slane %v35, %v329
    %v331 = vlaneseq
    %v332 = vshrl.u32 %v331, 7
    %v333 = vsub.s32 7, %v332
    %v334 = vrot.slane %v36, %v333
    %339 = vrot.lane.b32.xlu0 %v322, 16
    %v340 = vpop.permute.xlu0 %339
    %341 = vrot.lane.b32.xlu0 %v326, 16
    %v342 = vpop.permute.xlu0 %341
    %343 = vrot.lane.b32.xlu0 %v330, 16
    %v344 = vpop.permute.xlu0 %343
    %345 = vrot.lane.b32.xlu0 %v334, 16
    %v346 = vpop.permute.xlu0 %345
    %vm347 = vcmask 130048
    %v348 = vsel %vm347, %v340, %v342
    %v349 = vsel %vm347, %v342, %v344
    %v350 = vsel %vm347, %v344, %v346
    %v356 = vmul.f32 %v41, %v340
    %v357 = vmul.f32 %v42, %v348
    %v358 = vmul.f32 %v43, %v349
    %v359 = vmul.f32 %v44, %v350
    %v360 = vmul.f32 %v346, 0.0
    %v361 = vlaneseq
    %v362 = vshrl.u32 %v361, 7
    %v363 = vsub.s32 0, %v362
    %v364 = vrot.slane %v37, %v363
    %v365 = vlaneseq
    %v366 = vshrl.u32 %v365, 7
    %v367 = vsub.s32 0, %v366
    %v368 = vrot.slane %v38, %v367
    %v369 = vlaneseq
    %v370 = vshrl.u32 %v369, 7
    %v371 = vsub.s32 0, %v370
    %v372 = vrot.slane %v39, %v371
    %v373 = vlaneseq
    %v374 = vshrl.u32 %v373, 7
    %v375 = vsub.s32 0, %v374
    %v376 = vrot.slane %v40, %v375
    %381 = vrot.lane.b32.xlu0 %v364, 17
    %v382 = vpop.permute.xlu0 %381
    %383 = vrot.lane.b32.xlu0 %v368, 17
    %v384 = vpop.permute.xlu0 %383
    %385 = vrot.lane.b32.xlu0 %v372, 17
    %v386 = vpop.permute.xlu0 %385
    %387 = vrot.lane.b32.xlu0 %v376, 17
    %v388 = vpop.permute.xlu0 %387
    %vm389 = vcmask 138240
    %v390 = vsel %vm389, %v382, %v384
    %v391 = vsel %vm389, %v384, %v386
    %v392 = vsel %vm389, %v386, %v388
    %v398 = vmul.f32 %v41, %v382
    %v399 = vmul.f32 %v42, %v390
    %v400 = vmul.f32 %v43, %v391
    %v401 = vmul.f32 %v44, %v392
    %v402 = vmul.f32 %v388, 0.0
    %408 = vrot.lane.b32.xlu0 %v126, 127
    %v409 = vpop.permute.xlu0 %408
    %410 = vrot.lane.b32.xlu0 %v127, 127
    %v411 = vpop.permute.xlu0 %410
    %412 = vrot.lane.b32.xlu0 %v128, 127
    %v413 = vpop.permute.xlu0 %412
    %414 = vrot.lane.b32.xlu0 %v129, 127
    %v415 = vpop.permute.xlu0 %414
    %416 = vrot.lane.b32.xlu0 %v130, 127
    %v417 = vpop.permute.xlu0 %416
    %v418 = vsel %vm201, %v409, %v411
    %v419 = vsel %vm201, %v411, %v413
    %v420 = vsel %vm201, %v413, %v415
    %v421 = vsel %vm201, %v415, %v417
    %427 = vrot.lane.b32.xlu0 %v168, 126
    %v428 = vpop.permute.xlu0 %427
    %429 = vrot.lane.b32.xlu0 %v169, 126
    %v430 = vpop.permute.xlu0 %429
    %431 = vrot.lane.b32.xlu0 %v170, 126
    %v432 = vpop.permute.xlu0 %431
    %433 = vrot.lane.b32.xlu0 %v171, 126
    %v434 = vpop.permute.xlu0 %433
    %435 = vrot.lane.b32.xlu0 %v172, 126
    %v436 = vpop.permute.xlu0 %435
    %vm437 = vcmask 1031168
    %v438 = vsel %vm437, %v428, %v430
    %v439 = vsel %vm437, %v430, %v432
    %v440 = vsel %vm437, %v432, %v434
    %v441 = vsel %vm437, %v434, %v436
    %447 = vrot.lane.b32.xlu0 %v210, 112
    %v448 = vpop.permute.xlu0 %447
    %449 = vrot.lane.b32.xlu0 %v211, 112
    %v450 = vpop.permute.xlu0 %449
    %451 = vrot.lane.b32.xlu0 %v212, 112
    %v452 = vpop.permute.xlu0 %451
    %453 = vrot.lane.b32.xlu0 %v213, 112
    %v454 = vpop.permute.xlu0 %453
    %455 = vrot.lane.b32.xlu0 %v214, 112
    %v456 = vpop.permute.xlu0 %455
    %v457 = vsel %vm117, %v448, %v450
    %v458 = vsel %vm117, %v450, %v452
    %v459 = vsel %vm117, %v452, %v454
    %v460 = vsel %vm117, %v454, %v456
    %465 = vrot.lane.b32.xlu0 %v231, 111
    %v466 = vpop.permute.xlu0 %465
    %467 = vrot.lane.b32.xlu0 %v232, 111
    %v468 = vpop.permute.xlu0 %467
    %469 = vrot.lane.b32.xlu0 %v233, 111
    %v470 = vpop.permute.xlu0 %469
    %471 = vrot.lane.b32.xlu0 %v234, 111
    %v472 = vpop.permute.xlu0 %471
    %v473 = vsel %vm75, %v466, %v468
    %v474 = vsel %vm75, %v468, %v470
    %v475 = vsel %vm75, %v470, %v472
    %481 = vrot.lane.b32.xlu0 %v272, 110
    %v482 = vpop.permute.xlu0 %481
    %483 = vrot.lane.b32.xlu0 %v273, 110
    %v484 = vpop.permute.xlu0 %483
    %485 = vrot.lane.b32.xlu0 %v274, 110
    %v486 = vpop.permute.xlu0 %485
    %487 = vrot.lane.b32.xlu0 %v275, 110
    %v488 = vpop.permute.xlu0 %487
    %489 = vrot.lane.b32.xlu0 %v276, 110
    %v490 = vpop.permute.xlu0 %489
    %vm491 = vcmask 900096
    %v492 = vsel %vm491, %v482, %v484
    %v493 = vsel %vm491, %v484, %v486
    %v494 = vsel %vm491, %v486, %v488
    %v495 = vsel %vm491, %v488, %v490
    %501 = vrot.lane.b32.xlu0 %v314, 96
    %v502 = vpop.permute.xlu0 %501
    %503 = vrot.lane.b32.xlu0 %v315, 96
    %v504 = vpop.permute.xlu0 %503
    %505 = vrot.lane.b32.xlu0 %v316, 96
    %v506 = vpop.permute.xlu0 %505
    %507 = vrot.lane.b32.xlu0 %v317, 96
    %v508 = vpop.permute.xlu0 %507
    %509 = vrot.lane.b32.xlu0 %v318, 96
    %v510 = vpop.permute.xlu0 %509
    %vm511 = vcmask 785408
    %v512 = vsel %vm511, %v502, %v504
    %v513 = vsel %vm511, %v504, %v506
    %v514 = vsel %vm511, %v506, %v508
    %v515 = vsel %vm511, %v508, %v510
    %521 = vrot.lane.b32.xlu0 %v356, 95
    %v522 = vpop.permute.xlu0 %521
    %523 = vrot.lane.b32.xlu0 %v357, 95
    %v524 = vpop.permute.xlu0 %523
    %525 = vrot.lane.b32.xlu0 %v358, 95
    %v526 = vpop.permute.xlu0 %525
    %527 = vrot.lane.b32.xlu0 %v359, 95
    %v528 = vpop.permute.xlu0 %527
    %529 = vrot.lane.b32.xlu0 %v360, 95
    %v530 = vpop.permute.xlu0 %529
    %vm531 = vcmask 777216
    %v532 = vsel %vm531, %v522, %v524
    %v533 = vsel %vm531, %v524, %v526
    %v534 = vsel %vm531, %v526, %v528
    %v535 = vsel %vm531, %v528, %v530
    %541 = vrot.lane.b32.xlu0 %v398, 94
    %v542 = vpop.permute.xlu0 %541
    %543 = vrot.lane.b32.xlu0 %v399, 94
    %v544 = vpop.permute.xlu0 %543
    %545 = vrot.lane.b32.xlu0 %v400, 94
    %v546 = vpop.permute.xlu0 %545
    %547 = vrot.lane.b32.xlu0 %v401, 94
    %v548 = vpop.permute.xlu0 %547
    %549 = vrot.lane.b32.xlu0 %v402, 94
    %v550 = vpop.permute.xlu0 %549
    %vm551 = vcmask 769024
    %v552 = vsel %vm551, %v542, %v544
    %v553 = vsel %vm551, %v544, %v546
    %v554 = vsel %vm551, %v546, %v548
    %v555 = vsel %vm551, %v548, %v550
    %557 = vset.pattern.permute.xlu0 0
    %558 = vperm.xlu0 %557, %v46
    %v559 = vpop.permute.xlu0 %558
    %566 = vrot.lane.b32.xlu0 %v84, 17
    %v567 = vpop.permute.xlu0 %566
    %568 = vrot.lane.b32.xlu0 %v85, 17
    %v569 = vpop.permute.xlu0 %568
    %570 = vrot.lane.b32.xlu0 %v86, 17
    %v571 = vpop.permute.xlu0 %570
    %572 = vrot.lane.b32.xlu0 %v87, 17
    %v573 = vpop.permute.xlu0 %572
    %574 = vrot.lane.b32.xlu0 %v88, 17
    %v575 = vpop.permute.xlu0 %574
    %576 = vrot.lane.b32.xlu0 %v418, 17
    %v577 = vpop.permute.xlu0 %576
    %578 = vrot.lane.b32.xlu0 %v419, 17
    %v579 = vpop.permute.xlu0 %578
    %580 = vrot.lane.b32.xlu0 %v420, 17
    %v581 = vpop.permute.xlu0 %580
    %582 = vrot.lane.b32.xlu0 %v421, 17
    %v583 = vpop.permute.xlu0 %582
    %584 = vrot.lane.b32.xlu0 %v417, 17
    %v585 = vpop.permute.xlu0 %584
    %586 = vrot.lane.b32.xlu0 %v438, 17
    %v587 = vpop.permute.xlu0 %586
    %588 = vrot.lane.b32.xlu0 %v439, 17
    %v589 = vpop.permute.xlu0 %588
    %590 = vrot.lane.b32.xlu0 %v440, 17
    %v591 = vpop.permute.xlu0 %590
    %592 = vrot.lane.b32.xlu0 %v441, 17
    %v593 = vpop.permute.xlu0 %592
    %594 = vrot.lane.b32.xlu0 %v436, 17
    %v595 = vpop.permute.xlu0 %594
    %596 = vrot.lane.b32.xlu0 %v457, 17
    %v597 = vpop.permute.xlu0 %596
    %598 = vrot.lane.b32.xlu0 %v458, 17
    %v599 = vpop.permute.xlu0 %598
    %600 = vrot.lane.b32.xlu0 %v459, 17
    %v601 = vpop.permute.xlu0 %600
    %602 = vrot.lane.b32.xlu0 %v460, 17
    %v603 = vpop.permute.xlu0 %602
    %604 = vrot.lane.b32.xlu0 %v456, 17
    %v605 = vpop.permute.xlu0 %604
    %606 = vrot.lane.b32.xlu0 %v466, 17
    %v607 = vpop.permute.xlu0 %606
    %608 = vrot.lane.b32.xlu0 %v473, 17
    %v609 = vpop.permute.xlu0 %608
    %610 = vrot.lane.b32.xlu0 %v474, 17
    %v611 = vpop.permute.xlu0 %610
    %612 = vrot.lane.b32.xlu0 %v475, 17
    %v613 = vpop.permute.xlu0 %612
    %614 = vrot.lane.b32.xlu0 %v472, 17
    %v615 = vpop.permute.xlu0 %614
    %616 = vrot.lane.b32.xlu0 %v482, 17
    %v617 = vpop.permute.xlu0 %616
    %618 = vrot.lane.b32.xlu0 %v492, 17
    %v619 = vpop.permute.xlu0 %618
    %620 = vrot.lane.b32.xlu0 %v493, 17
    %v621 = vpop.permute.xlu0 %620
    %622 = vrot.lane.b32.xlu0 %v494, 17
    %v623 = vpop.permute.xlu0 %622
    %624 = vrot.lane.b32.xlu0 %v495, 17
    %v625 = vpop.permute.xlu0 %624
    %626 = vrot.lane.b32.xlu0 %v502, 17
    %v627 = vpop.permute.xlu0 %626
    %628 = vrot.lane.b32.xlu0 %v512, 17
    %v629 = vpop.permute.xlu0 %628
    %630 = vrot.lane.b32.xlu0 %v513, 17
    %v631 = vpop.permute.xlu0 %630
    %632 = vrot.lane.b32.xlu0 %v514, 17
    %v633 = vpop.permute.xlu0 %632
    %634 = vrot.lane.b32.xlu0 %v515, 17
    %v635 = vpop.permute.xlu0 %634
    %636 = vrot.lane.b32.xlu0 %v522, 17
    %v637 = vpop.permute.xlu0 %636
    %638 = vrot.lane.b32.xlu0 %v532, 17
    %v639 = vpop.permute.xlu0 %638
    %640 = vrot.lane.b32.xlu0 %v533, 17
    %v641 = vpop.permute.xlu0 %640
    %642 = vrot.lane.b32.xlu0 %v534, 17
    %v643 = vpop.permute.xlu0 %642
    %644 = vrot.lane.b32.xlu0 %v535, 17
    %v645 = vpop.permute.xlu0 %644
    %646 = vrot.lane.b32.xlu0 %v542, 17
    %v647 = vpop.permute.xlu0 %646
    %648 = vrot.lane.b32.xlu0 %v552, 17
    %v649 = vpop.permute.xlu0 %648
    %650 = vrot.lane.b32.xlu0 %v553, 17
    %v651 = vpop.permute.xlu0 %650
    %652 = vrot.lane.b32.xlu0 %v554, 17
    %v653 = vpop.permute.xlu0 %652
    %654 = vrot.lane.b32.xlu0 %v555, 17
    %v655 = vpop.permute.xlu0 %654
    %v656 = vsel %vm389, %v567, %v569
    %v657 = vsel %vm389, %v569, %v571
    %v658 = vsel %vm389, %v571, %v573
    %v659 = vsel %vm389, %v573, %v575
    %v660 = vsel %vm389, %v577, %v579
    %v661 = vsel %vm389, %v579, %v581
    %v662 = vsel %vm389, %v581, %v583
    %v663 = vsel %vm389, %v583, %v585
    %v664 = vsel %vm389, %v587, %v589
    %v665 = vsel %vm389, %v589, %v591
    %v666 = vsel %vm389, %v591, %v593
    %v667 = vsel %vm389, %v593, %v595
    %v668 = vsel %vm389, %v597, %v599
    %v669 = vsel %vm389, %v599, %v601
    %v670 = vsel %vm389, %v601, %v603
    %v671 = vsel %vm389, %v603, %v605
    %v672 = vsel %vm389, %v607, %v609
    %v673 = vsel %vm389, %v609, %v611
    %v674 = vsel %vm389, %v611, %v613
    %v675 = vsel %vm389, %v613, %v615
    %v676 = vsel %vm389, %v617, %v619
    %v677 = vsel %vm389, %v619, %v621
    %v678 = vsel %vm389, %v621, %v623
    %v679 = vsel %vm389, %v623, %v625
    %v680 = vsel %vm389, %v627, %v629
    %v681 = vsel %vm389, %v629, %v631
    %v682 = vsel %vm389, %v631, %v633
    %v683 = vsel %vm389, %v633, %v635
    %v684 = vsel %vm389, %v637, %v639
    %v685 = vsel %vm389, %v639, %v641
    %v686 = vsel %vm389, %v641, %v643
    %v687 = vsel %vm389, %v643, %v645
    %v688 = vsel %vm389, %v647, %v649
    %v689 = vsel %vm389, %v649, %v651
    %v690 = vsel %vm389, %v651, %v653
    %v691 = vsel %vm389, %v653, %v655
    %vm728 = vcmask 588800
    %v730 = vsel %vm728, %v45, 0
    %732 = vmatprep.subr.mxu0 %v657
    %733 = vmatpush1.msra.mxu0 %v656
    %734 = vmatprep.subr.mxu0 %v661
    %735 = vmatpush1.msra.mxu0 %v660
    %736 = vmatprep.subr.mxu0 %v665
    %737 = vmatpush1.msra.mxu0 %v664
    %738 = vmatprep.subr.mxu0 %v669
    %739 = vmatpush1.msra.mxu0 %v668
    %740 = vmatprep.subr.mxu0 %v673
    %741 = vmatpush1.msra.mxu0 %v672
    %742 = vmatprep.subr.mxu0 %v677
    %743 = vmatpush1.msra.mxu0 %v676
    %744 = vmatprep.subr.mxu0 %v681
    %745 = vmatpush1.msra.mxu0 %v680
    %746 = vmatprep.subr.mxu0 %v685
    %747 = vmatpush1.msra.mxu0 %v684
    %748 = vmatprep.subr.mxu0 %v689
    %749 = vmatpush1.msra.mxu0 %v688
    %750 = vmatprep.subr.mxu0 0.0
    %751 = vmatpush1.msra.mxu0 0.0
    %752 = vmatprep.subr.mxu0 0.0
    %753 = vmatpush1.msra.mxu0 0.0
    %754 = vmatprep.subr.mxu0 0.0
    %755 = vmatpush1.msra.mxu0 0.0
    %756 = vmatprep.subr.mxu0 0.0
    %757 = vmatpush1.msra.mxu0 0.0
    %758 = vmatprep.subr.mxu0 0.0
    %759 = vmatpush1.msra.mxu0 0.0
    %760 = vmatprep.subr.mxu0 0.0
    %761 = vmatpush1.msra.mxu0 0.0
    %762 = vmatprep.subr.mxu0 0.0
    %763 = vmatpush1.msra.mxu0 0.0
    %764 = vmatprep.subr.mxu0 0.0
    %765 = vmatpush1.msra.mxu0 0.0
    %766 = vmatprep.subr.mxu0 0.0
    %767 = vmatpush1.msra.mxu0 0.0
    %768 = vmatprep.subr.mxu0 0.0
    %769 = vmatpush1.msra.mxu0 0.0
    %770 = vmatprep.subr.mxu0 0.0
    %771 = vmatpush1.msra.mxu0 0.0
    %772 = vmatprep.subr.mxu0 0.0
    %773 = vmatpush1.msra.mxu0 0.0
    %774 = vmatprep.subr.mxu0 0.0
    %775 = vmatpush1.msra.mxu0 0.0
    %776 = vmatprep.subr.mxu0 0.0
    %777 = vmatpush1.msra.mxu0 0.0
    %778 = vmatprep.subr.mxu0 0.0
    %779 = vmatpush1.msra.mxu0 0.0
    %780 = vmatprep.subr.mxu0 0.0
    %781 = vmatpush1.msra.mxu0 0.0
    %782 = vmatprep.subr.mxu0 0.0
    %783 = vmatpush1.msra.mxu0 0.0
    %784 = vmatprep.subr.mxu0 0.0
    %785 = vmatpush1.msra.mxu0 0.0
    %786 = vmatprep.subr.mxu0 0.0
    %787 = vmatpush1.msra.mxu0 0.0
    %788 = vmatprep.subr.mxu0 0.0
    %789 = vmatpush1.msra.mxu0 0.0
    %790 = vmatprep.subr.mxu0 0.0
    %791 = vmatpush1.msra.mxu0 0.0
    %792 = vmatprep.subr.mxu0 0.0
    %793 = vmatpush1.msra.mxu0 0.0
    %794 = vmatprep.subr.mxu0 0.0
    %795 = vmatpush1.msra.mxu0 0.0
    %796 = vmatprep.mubr.f32.mxu0 0.0
    %797 = vmatmul.mubr.f32.gmra.mrb[0].mxu0 %v730
    %v798 = vpop.f32.mrb[0].mxu0
    %v799 = vadd.f32 %v559, %v798
    %v800 = vpop.f32.mrb[0].mxu0
    %v801 = vadd.f32 %v559, %v800
    %802 = vdwg.mxu0
    %803 = vmatprep.subr.mxu0 %v659
    %804 = vmatpush1.msra.mxu0 %v658
    %805 = vmatprep.subr.mxu0 %v663
    %806 = vmatpush1.msra.mxu0 %v662
    %807 = vmatprep.subr.mxu0 %v667
    %808 = vmatpush1.msra.mxu0 %v666
    %809 = vmatprep.subr.mxu0 %v671
    %810 = vmatpush1.msra.mxu0 %v670
    %811 = vmatprep.subr.mxu0 %v675
    %812 = vmatpush1.msra.mxu0 %v674
    %813 = vmatprep.subr.mxu0 %v679
    %814 = vmatpush1.msra.mxu0 %v678
    %815 = vmatprep.subr.mxu0 %v683
    %816 = vmatpush1.msra.mxu0 %v682
    %817 = vmatprep.subr.mxu0 %v687
    %818 = vmatpush1.msra.mxu0 %v686
    %819 = vmatprep.subr.mxu0 %v691
    %820 = vmatpush1.msra.mxu0 %v690
    %821 = vmatprep.subr.mxu0 0.0
    %822 = vmatpush1.msra.mxu0 0.0
    %823 = vmatprep.subr.mxu0 0.0
    %824 = vmatpush1.msra.mxu0 0.0
    %825 = vmatprep.subr.mxu0 0.0
    %826 = vmatpush1.msra.mxu0 0.0
    %827 = vmatprep.subr.mxu0 0.0
    %828 = vmatpush1.msra.mxu0 0.0
    %829 = vmatprep.subr.mxu0 0.0
    %830 = vmatpush1.msra.mxu0 0.0
    %831 = vmatprep.subr.mxu0 0.0
    %832 = vmatpush1.msra.mxu0 0.0
    %833 = vmatprep.subr.mxu0 0.0
    %834 = vmatpush1.msra.mxu0 0.0
    %835 = vmatprep.subr.mxu0 0.0
    %836 = vmatpush1.msra.mxu0 0.0
    %837 = vmatprep.subr.mxu0 0.0
    %838 = vmatpush1.msra.mxu0 0.0
    %839 = vmatprep.subr.mxu0 0.0
    %840 = vmatpush1.msra.mxu0 0.0
    %841 = vmatprep.subr.mxu0 0.0
    %842 = vmatpush1.msra.mxu0 0.0
    %843 = vmatprep.subr.mxu0 0.0
    %844 = vmatpush1.msra.mxu0 0.0
    %845 = vmatprep.subr.mxu0 0.0
    %846 = vmatpush1.msra.mxu0 0.0
    %847 = vmatprep.subr.mxu0 0.0
    %848 = vmatpush1.msra.mxu0 0.0
    %849 = vmatprep.subr.mxu0 0.0
    %850 = vmatpush1.msra.mxu0 0.0
    %851 = vmatprep.subr.mxu0 0.0
    %852 = vmatpush1.msra.mxu0 0.0
    %853 = vmatprep.subr.mxu0 0.0
    %854 = vmatpush1.msra.mxu0 0.0
    %855 = vmatprep.subr.mxu0 0.0
    %856 = vmatpush1.msra.mxu0 0.0
    %857 = vmatprep.subr.mxu0 0.0
    %858 = vmatpush1.msra.mxu0 0.0
    %859 = vmatprep.subr.mxu0 0.0
    %860 = vmatpush1.msra.mxu0 0.0
    %861 = vmatprep.subr.mxu0 0.0
    %862 = vmatpush1.msra.mxu0 0.0
    %863 = vmatprep.subr.mxu0 0.0
    %864 = vmatpush1.msra.mxu0 0.0
    %865 = vmatprep.subr.mxu0 0.0
    %866 = vmatpush1.msra.mxu0 0.0
    %867 = vmatprep.mubr.f32.mxu0 0.0
    %868 = vmatmul.mubr.f32.gmra.mrb[0].mxu0 %v730
    %v869 = vpop.f32.mrb[0].mxu0
    %v870 = vadd.f32 %v559, %v869
    %v871 = vpop.f32.mrb[0].mxu0
    %v872 = vadd.f32 %v559, %v871
    %873 = vdwg.mxu0
    %v874 = vmax.f32 %v799, 0.0
    %v875 = vmax.f32 %v801, 0.0
    %v876 = vmax.f32 %v870, 0.0
    %v877 = vmax.f32 %v872, 0.0
    %v878 = vld [vmem:[%s5] sm:$0xff]
    %v879 = vld [vmem:[%s5 + $0x8] sm:$0xff]
    %v880 = vld [vmem:[%s6] sm:$0xff]
    %v881 = vld [vmem:[%s6 + $0x8] sm:$0xff]
    %v882 = vmul.f32 %v874, %v76
    %v883 = vmul.f32 %v875, %v77
    %v884 = vmul.f32 %v876, %v78
    %v885 = vmul.f32 %v877, %v74
    %v886 = vmul.f32 %v874, %v118
    %v887 = vmul.f32 %v875, %v119
    %v888 = vmul.f32 %v876, %v120
    %v889 = vmul.f32 %v877, %v116
    %v890 = vmul.f32 %v874, %v160
    %v891 = vmul.f32 %v875, %v161
    %v892 = vmul.f32 %v876, %v162
    %v893 = vmul.f32 %v877, %v158
    %v894 = vmul.f32 %v874, %v202
    %v895 = vmul.f32 %v875, %v203
    %v896 = vmul.f32 %v876, %v204
    %v897 = vmul.f32 %v877, %v200
    %v898 = vmul.f32 %v874, %v218
    %v899 = vmul.f32 %v875, %v222
    %v900 = vmul.f32 %v876, %v226
    %v901 = vmul.f32 %v877, %v230
    %v902 = vmul.f32 %v874, %v256
    %v903 = vmul.f32 %v875, %v264
    %v904 = vmul.f32 %v876, %v265
    %v905 = vmul.f32 %v877, %v266
    %v906 = vmul.f32 %v874, %v298
    %v907 = vmul.f32 %v875, %v306
    %v908 = vmul.f32 %v876, %v307
    %v909 = vmul.f32 %v877, %v308
    %v910 = vmul.f32 %v874, %v340
    %v911 = vmul.f32 %v875, %v348
    %v912 = vmul.f32 %v876, %v349
    %v913 = vmul.f32 %v877, %v350
    %v914 = vmul.f32 %v874, %v382
    %v915 = vmul.f32 %v875, %v390
    %v916 = vmul.f32 %v876, %v391
    %v917 = vmul.f32 %v877, %v392
    %922 = vrot.lane.b32.xlu0 %v886, 127
    %v923 = vpop.permute.xlu0 %922
    %924 = vrot.lane.b32.xlu0 %v887, 127
    %v925 = vpop.permute.xlu0 %924
    %926 = vrot.lane.b32.xlu0 %v888, 127
    %v927 = vpop.permute.xlu0 %926
    %928 = vrot.lane.b32.xlu0 %v889, 127
    %v929 = vpop.permute.xlu0 %928
    %v930 = vsel %vm201, %v409, %v923
    %v931 = vsel %vm201, %v923, %v925
    %v932 = vsel %vm201, %v925, %v927
    %v933 = vsel %vm201, %v927, %v929
    %938 = vrot.lane.b32.xlu0 %v890, 126
    %v939 = vpop.permute.xlu0 %938
    %940 = vrot.lane.b32.xlu0 %v891, 126
    %v941 = vpop.permute.xlu0 %940
    %942 = vrot.lane.b32.xlu0 %v892, 126
    %v943 = vpop.permute.xlu0 %942
    %944 = vrot.lane.b32.xlu0 %v893, 126
    %v945 = vpop.permute.xlu0 %944
    %v946 = vsel %vm437, %v428, %v939
    %v947 = vsel %vm437, %v939, %v941
    %v948 = vsel %vm437, %v941, %v943
    %v949 = vsel %vm437, %v943, %v945
    %954 = vrot.lane.b32.xlu0 %v894, 112
    %v955 = vpop.permute.xlu0 %954
    %956 = vrot.lane.b32.xlu0 %v895, 112
    %v957 = vpop.permute.xlu0 %956
    %958 = vrot.lane.b32.xlu0 %v896, 112
    %v959 = vpop.permute.xlu0 %958
    %960 = vrot.lane.b32.xlu0 %v897, 112
    %v961 = vpop.permute.xlu0 %960
    %v962 = vsel %vm117, %v448, %v955
    %v963 = vsel %vm117, %v955, %v957
    %v964 = vsel %vm117, %v957, %v959
    %v965 = vsel %vm117, %v959, %v961
    %970 = vrot.lane.b32.xlu0 %v898, 111
    %v971 = vpop.permute.xlu0 %970
    %972 = vrot.lane.b32.xlu0 %v899, 111
    %v973 = vpop.permute.xlu0 %972
    %974 = vrot.lane.b32.xlu0 %v900, 111
    %v975 = vpop.permute.xlu0 %974
    %976 = vrot.lane.b32.xlu0 %v901, 111
    %v977 = vpop.permute.xlu0 %976
    %v978 = vsel %vm75, %v971, %v973
    %v979 = vsel %vm75, %v973, %v975
    %v980 = vsel %vm75, %v975, %v977
    %985 = vrot.lane.b32.xlu0 %v902, 110
    %v986 = vpop.permute.xlu0 %985
    %987 = vrot.lane.b32.xlu0 %v903, 110
    %v988 = vpop.permute.xlu0 %987
    %989 = vrot.lane.b32.xlu0 %v904, 110
    %v990 = vpop.permute.xlu0 %989
    %991 = vrot.lane.b32.xlu0 %v905, 110
    %v992 = vpop.permute.xlu0 %991
    %v993 = vsel %vm491, %v986, %v988
    %v994 = vsel %vm491, %v988, %v990
    %v995 = vsel %vm491, %v990, %v992
    %v996 = vsel %vm491, %v992, %v490
    %1001 = vrot.lane.b32.xlu0 %v906, 96
    %v1002 = vpop.permute.xlu0 %1001
    %1003 = vrot.lane.b32.xlu0 %v907, 96
    %v1004 = vpop.permute.xlu0 %1003
    %1005 = vrot.lane.b32.xlu0 %v908, 96
    %v1006 = vpop.permute.xlu0 %1005
    %1007 = vrot.lane.b32.xlu0 %v909, 96
    %v1008 = vpop.permute.xlu0 %1007
    %v1009 = vsel %vm511, %v1002, %v1004
    %v1010 = vsel %vm511, %v1004, %v1006
    %v1011 = vsel %vm511, %v1006, %v1008
    %v1012 = vsel %vm511, %v1008, %v510
    %1017 = vrot.lane.b32.xlu0 %v910, 95
    %v1018 = vpop.permute.xlu0 %1017
    %1019 = vrot.lane.b32.xlu0 %v911, 95
    %v1020 = vpop.permute.xlu0 %1019
    %1021 = vrot.lane.b32.xlu0 %v912, 95
    %v1022 = vpop.permute.xlu0 %1021
    %1023 = vrot.lane.b32.xlu0 %v913, 95
    %v1024 = vpop.permute.xlu0 %1023
    %v1025 = vsel %vm531, %v1018, %v1020
    %v1026 = vsel %vm531, %v1020, %v1022
    %v1027 = vsel %vm531, %v1022, %v1024
    %v1028 = vsel %vm531, %v1024, %v530
    %1033 = vrot.lane.b32.xlu0 %v914, 94
    %v1034 = vpop.permute.xlu0 %1033
    %1035 = vrot.lane.b32.xlu0 %v915, 94
    %v1036 = vpop.permute.xlu0 %1035
    %1037 = vrot.lane.b32.xlu0 %v916, 94
    %v1038 = vpop.permute.xlu0 %1037
    %1039 = vrot.lane.b32.xlu0 %v917, 94
    %v1040 = vpop.permute.xlu0 %1039
    %v1041 = vsel %vm551, %v1034, %v1036
    %v1042 = vsel %vm551, %v1036, %v1038
    %v1043 = vsel %vm551, %v1038, %v1040
    %v1044 = vsel %vm551, %v1040, %v550
    %1046 = vset.pattern.permute.xlu0 0
    %1047 = vperm.xlu0 %1046, %v880
    %v1048 = vpop.permute.xlu0 %1047
    %1051 = vset.pattern.permute.xlu0 0
    %1052 = vperm.xlu0 %1051, %v881
    %v1053 = vpop.permute.xlu0 %1052
    %1059 = vrot.lane.b32.xlu0 %v882, 17
    %v1060 = vpop.permute.xlu0 %1059
    %1061 = vrot.lane.b32.xlu0 %v883, 17
    %v1062 = vpop.permute.xlu0 %1061
    %1063 = vrot.lane.b32.xlu0 %v884, 17
    %v1064 = vpop.permute.xlu0 %1063
    %1065 = vrot.lane.b32.xlu0 %v885, 17
    %v1066 = vpop.permute.xlu0 %1065
    %1067 = vrot.lane.b32.xlu0 %v930, 17
    %v1068 = vpop.permute.xlu0 %1067
    %1069 = vrot.lane.b32.xlu0 %v931, 17
    %v1070 = vpop.permute.xlu0 %1069
    %1071 = vrot.lane.b32.xlu0 %v932, 17
    %v1072 = vpop.permute.xlu0 %1071
    %1073 = vrot.lane.b32.xlu0 %v933, 17
    %v1074 = vpop.permute.xlu0 %1073
    %1075 = vrot.lane.b32.xlu0 %v929, 17
    %v1076 = vpop.permute.xlu0 %1075
    %1077 = vrot.lane.b32.xlu0 %v946, 17
    %v1078 = vpop.permute.xlu0 %1077
    %1079 = vrot.lane.b32.xlu0 %v947, 17
    %v1080 = vpop.permute.xlu0 %1079
    %1081 = vrot.lane.b32.xlu0 %v948, 17
    %v1082 = vpop.permute.xlu0 %1081
    %1083 = vrot.lane.b32.xlu0 %v949, 17
    %v1084 = vpop.permute.xlu0 %1083
    %1085 = vrot.lane.b32.xlu0 %v945, 17
    %v1086 = vpop.permute.xlu0 %1085
    %1087 = vrot.lane.b32.xlu0 %v962, 17
    %v1088 = vpop.permute.xlu0 %1087
    %1089 = vrot.lane.b32.xlu0 %v963, 17
    %v1090 = vpop.permute.xlu0 %1089
    %1091 = vrot.lane.b32.xlu0 %v964, 17
    %v1092 = vpop.permute.xlu0 %1091
    %1093 = vrot.lane.b32.xlu0 %v965, 17
    %v1094 = vpop.permute.xlu0 %1093
    %1095 = vrot.lane.b32.xlu0 %v961, 17
    %v1096 = vpop.permute.xlu0 %1095
    %1097 = vrot.lane.b32.xlu0 %v971, 17
    %v1098 = vpop.permute.xlu0 %1097
    %1099 = vrot.lane.b32.xlu0 %v978, 17
    %v1100 = vpop.permute.xlu0 %1099
    %1101 = vrot.lane.b32.xlu0 %v979, 17
    %v1102 = vpop.permute.xlu0 %1101
    %1103 = vrot.lane.b32.xlu0 %v980, 17
    %v1104 = vpop.permute.xlu0 %1103
    %1105 = vrot.lane.b32.xlu0 %v977, 17
    %v1106 = vpop.permute.xlu0 %1105
    %1107 = vrot.lane.b32.xlu0 %v986, 17
    %v1108 = vpop.permute.xlu0 %1107
    %1109 = vrot.lane.b32.xlu0 %v993, 17
    %v1110 = vpop.permute.xlu0 %1109
    %1111 = vrot.lane.b32.xlu0 %v994, 17
    %v1112 = vpop.permute.xlu0 %1111
    %1113 = vrot.lane.b32.xlu0 %v995, 17
    %v1114 = vpop.permute.xlu0 %1113
    %1115 = vrot.lane.b32.xlu0 %v996, 17
    %v1116 = vpop.permute.xlu0 %1115
    %1117 = vrot.lane.b32.xlu0 %v1002, 17
    %v1118 = vpop.permute.xlu0 %1117
    %1119 = vrot.lane.b32.xlu0 %v1009, 17
    %v1120 = vpop.permute.xlu0 %1119
    %1121 = vrot.lane.b32.xlu0 %v1010, 17
    %v1122 = vpop.permute.xlu0 %1121
    %1123 = vrot.lane.b32.xlu0 %v1011, 17
    %v1124 = vpop.permute.xlu0 %1123
    %1125 = vrot.lane.b32.xlu0 %v1012, 17
    %v1126 = vpop.permute.xlu0 %1125
    %1127 = vrot.lane.b32.xlu0 %v1018, 17
    %v1128 = vpop.permute.xlu0 %1127
    %1129 = vrot.lane.b32.xlu0 %v1025, 17
    %v1130 = vpop.permute.xlu0 %1129
    %1131 = vrot.lane.b32.xlu0 %v1026, 17
    %v1132 = vpop.permute.xlu0 %1131
    %1133 = vrot.lane.b32.xlu0 %v1027, 17
    %v1134 = vpop.permute.xlu0 %1133
    %1135 = vrot.lane.b32.xlu0 %v1028, 17
    %v1136 = vpop.permute.xlu0 %1135
    %1137 = vrot.lane.b32.xlu0 %v1034, 17
    %v1138 = vpop.permute.xlu0 %1137
    %1139 = vrot.lane.b32.xlu0 %v1041, 17
    %v1140 = vpop.permute.xlu0 %1139
    %1141 = vrot.lane.b32.xlu0 %v1042, 17
    %v1142 = vpop.permute.xlu0 %1141
    %1143 = vrot.lane.b32.xlu0 %v1043, 17
    %v1144 = vpop.permute.xlu0 %1143
    %1145 = vrot.lane.b32.xlu0 %v1044, 17
    %v1146 = vpop.permute.xlu0 %1145
    %v1147 = vsel %vm389, %v567, %v1060
    %v1148 = vsel %vm389, %v1060, %v1062
    %v1149 = vsel %vm389, %v1062, %v1064
    %v1150 = vsel %vm389, %v1064, %v1066
    %v1151 = vsel %vm389, %v1068, %v1070
    %v1152 = vsel %vm389, %v1070, %v1072
    %v1153 = vsel %vm389, %v1072, %v1074
    %v1154 = vsel %vm389, %v1074, %v1076
    %v1155 = vsel %vm389, %v1078, %v1080
    %v1156 = vsel %vm389, %v1080, %v1082
    %v1157 = vsel %vm389, %v1082, %v1084
    %v1158 = vsel %vm389, %v1084, %v1086
    %v1159 = vsel %vm389, %v1088, %v1090
    %v1160 = vsel %vm389, %v1090, %v1092
    %v1161 = vsel %vm389, %v1092, %v1094
    %v1162 = vsel %vm389, %v1094, %v1096
    %v1163 = vsel %vm389, %v1098, %v1100
    %v1164 = vsel %vm389, %v1100, %v1102
    %v1165 = vsel %vm389, %v1102, %v1104
    %v1166 = vsel %vm389, %v1104, %v1106
    %v1167 = vsel %vm389, %v1108, %v1110
    %v1168 = vsel %vm389, %v1110, %v1112
    %v1169 = vsel %vm389, %v1112, %v1114
    %v1170 = vsel %vm389, %v1114, %v1116
    %v1171 = vsel %vm389, %v1118, %v1120
    %v1172 = vsel %vm389, %v1120, %v1122
    %v1173 = vsel %vm389, %v1122, %v1124
    %v1174 = vsel %vm389, %v1124, %v1126
    %v1175 = vsel %vm389, %v1128, %v1130
    %v1176 = vsel %vm389, %v1130, %v1132
    %v1177 = vsel %vm389, %v1132, %v1134
    %v1178 = vsel %vm389, %v1134, %v1136
    %v1179 = vsel %vm389, %v1138, %v1140
    %v1180 = vsel %vm389, %v1140, %v1142
    %v1181 = vsel %vm389, %v1142, %v1144
    %v1182 = vsel %vm389, %v1144, %v1146
    %v1220 = vsel %vm728, %v878, 0
    %v1223 = vsel %vm728, %v879, 0
    %1225 = vmatprep.subr.mxu0 %v1148
    %1226 = vmatpush1.msra.mxu0 %v1147
    %1227 = vmatprep.subr.mxu0 %v1152
    %1228 = vmatpush1.msra.mxu0 %v1151
    %1229 = vmatprep.subr.mxu0 %v1156
    %1230 = vmatpush1.msra.mxu0 %v1155
    %1231 = vmatprep.subr.mxu0 %v1160
    %1232 = vmatpush1.msra.mxu0 %v1159
    %1233 = vmatprep.subr.mxu0 %v1164
    %1234 = vmatpush1.msra.mxu0 %v1163
    %1235 = vmatprep.subr.mxu0 %v1168
    %1236 = vmatpush1.msra.mxu0 %v1167
    %1237 = vmatprep.subr.mxu0 %v1172
    %1238 = vmatpush1.msra.mxu0 %v1171
    %1239 = vmatprep.subr.mxu0 %v1176
    %1240 = vmatpush1.msra.mxu0 %v1175
    %1241 = vmatprep.subr.mxu0 %v1180
    %1242 = vmatpush1.msra.mxu0 %v1179
    %1243 = vmatprep.subr.mxu0 0.0
    %1244 = vmatpush1.msra.mxu0 0.0
    %1245 = vmatprep.subr.mxu0 0.0
    %1246 = vmatpush1.msra.mxu0 0.0
    %1247 = vmatprep.subr.mxu0 0.0
    %1248 = vmatpush1.msra.mxu0 0.0
    %1249 = vmatprep.subr.mxu0 0.0
    %1250 = vmatpush1.msra.mxu0 0.0
    %1251 = vmatprep.subr.mxu0 0.0
    %1252 = vmatpush1.msra.mxu0 0.0
    %1253 = vmatprep.subr.mxu0 0.0
    %1254 = vmatpush1.msra.mxu0 0.0
    %1255 = vmatprep.subr.mxu0 0.0
    %1256 = vmatpush1.msra.mxu0 0.0
    %1257 = vmatprep.subr.mxu0 0.0
    %1258 = vmatpush1.msra.mxu0 0.0
    %1259 = vmatprep.subr.mxu0 0.0
    %1260 = vmatpush1.msra.mxu0 0.0
    %1261 = vmatprep.subr.mxu0 0.0
    %1262 = vmatpush1.msra.mxu0 0.0
    %1263 = vmatprep.subr.mxu0 0.0
    %1264 = vmatpush1.msra.mxu0 0.0
    %1265 = vmatprep.subr.mxu0 0.0
    %1266 = vmatpush1.msra.mxu0 0.0
    %1267 = vmatprep.subr.mxu0 0.0
    %1268 = vmatpush1.msra.mxu0 0.0
    %1269 = vmatprep.subr.mxu0 0.0
    %1270 = vmatpush1.msra.mxu0 0.0
    %1271 = vmatprep.subr.mxu0 0.0
    %1272 = vmatpush1.msra.mxu0 0.0
    %1273 = vmatprep.subr.mxu0 0.0
    %1274 = vmatpush1.msra.mxu0 0.0
    %1275 = vmatprep.subr.mxu0 0.0
    %1276 = vmatpush1.msra.mxu0 0.0
    %1277 = vmatprep.subr.mxu0 0.0
    %1278 = vmatpush1.msra.mxu0 0.0
    %1279 = vmatprep.subr.mxu0 0.0
    %1280 = vmatpush1.msra.mxu0 0.0
    %1281 = vmatprep.subr.mxu0 0.0
    %1282 = vmatpush1.msra.mxu0 0.0
    %1283 = vmatprep.subr.mxu0 0.0
    %1284 = vmatpush1.msra.mxu0 0.0
    %1285 = vmatprep.subr.mxu0 0.0
    %1286 = vmatpush1.msra.mxu0 0.0
    %1287 = vmatprep.subr.mxu0 0.0
    %1288 = vmatpush1.msra.mxu0 0.0
    %1289 = vmatprep.mubr.f32.mxu0 0.0
    %1290 = vmatmul.mubr.f32.gmra.mrb[0].mxu0 %v1220
    %v1291 = vpop.f32.mrb[0].mxu0
    %v1292 = vadd.f32 %v1048, %v1291
    %v1293 = vpop.f32.mrb[0].mxu0
    %v1294 = vadd.f32 %v1048, %v1293
    %1295 = vmatprep.mubr.f32.mxu0 0.0
    %1296 = vmatmul.mubr.f32.gmra.mrb[0].mxu0 %v1223
    %v1297 = vpop.f32.mrb[0].mxu0
    %v1298 = vadd.f32 %v1053, %v1297
    %v1299 = vpop.f32.mrb[0].mxu0
    %v1300 = vadd.f32 %v1053, %v1299
    %1301 = vdwg.mxu0
    %1302 = vmatprep.subr.mxu0 %v1150
    %1303 = vmatpush1.msra.mxu0 %v1149
    %1304 = vmatprep.subr.mxu0 %v1154
    %1305 = vmatpush1.msra.mxu0 %v1153
    %1306 = vmatprep.subr.mxu0 %v1158
    %1307 = vmatpush1.msra.mxu0 %v1157
    %1308 = vmatprep.subr.mxu0 %v1162
    %1309 = vmatpush1.msra.mxu0 %v1161
    %1310 = vmatprep.subr.mxu0 %v1166
    %1311 = vmatpush1.msra.mxu0 %v1165
    %1312 = vmatprep.subr.mxu0 %v1170
    %1313 = vmatpush1.msra.mxu0 %v1169
    %1314 = vmatprep.subr.mxu0 %v1174
    %1315 = vmatpush1.msra.mxu0 %v1173
    %1316 = vmatprep.subr.mxu0 %v1178
    %1317 = vmatpush1.msra.mxu0 %v1177
    %1318 = vmatprep.subr.mxu0 %v1182
    %1319 = vmatpush1.msra.mxu0 %v1181
    %1320 = vmatprep.subr.mxu0 0.0
    %1321 = vmatpush1.msra.mxu0 0.0
    %1322 = vmatprep.subr.mxu0 0.0
    %1323 = vmatpush1.msra.mxu0 0.0
    %1324 = vmatprep.subr.mxu0 0.0
    %1325 = vmatpush1.msra.mxu0 0.0
    %1326 = vmatprep.subr.mxu0 0.0
    %1327 = vmatpush1.msra.mxu0 0.0
    %1328 = vmatprep.subr.mxu0 0.0
    %1329 = vmatpush1.msra.mxu0 0.0
    %1330 = vmatprep.subr.mxu0 0.0
    %1331 = vmatpush1.msra.mxu0 0.0
    %1332 = vmatprep.subr.mxu0 0.0
    %1333 = vmatpush1.msra.mxu0 0.0
    %1334 = vmatprep.subr.mxu0 0.0
    %1335 = vmatpush1.msra.mxu0 0.0
    %1336 = vmatprep.subr.mxu0 0.0
    %1337 = vmatpush1.msra.mxu0 0.0
    %1338 = vmatprep.subr.mxu0 0.0
    %1339 = vmatpush1.msra.mxu0 0.0
    %1340 = vmatprep.subr.mxu0 0.0
    %1341 = vmatpush1.msra.mxu0 0.0
    %1342 = vmatprep.subr.mxu0 0.0
    %1343 = vmatpush1.msra.mxu0 0.0
    %1344 = vmatprep.subr.mxu0 0.0
    %1345 = vmatpush1.msra.mxu0 0.0
    %1346 = vmatprep.subr.mxu0 0.0
    %1347 = vmatpush1.msra.mxu0 0.0
    %1348 = vmatprep.subr.mxu0 0.0
    %1349 = vmatpush1.msra.mxu0 0.0
    %1350 = vmatprep.subr.mxu0 0.0
    %1351 = vmatpush1.msra.mxu0 0.0
    %1352 = vmatprep.subr.mxu0 0.0
    %1353 = vmatpush1.msra.mxu0 0.0
    %1354 = vmatprep.subr.mxu0 0.0
    %1355 = vmatpush1.msra.mxu0 0.0
    %1356 = vmatprep.subr.mxu0 0.0
    %1357 = vmatpush1.msra.mxu0 0.0
    %1358 = vmatprep.subr.mxu0 0.0
    %1359 = vmatpush1.msra.mxu0 0.0
    %1360 = vmatprep.subr.mxu0 0.0
    %1361 = vmatpush1.msra.mxu0 0.0
    %1362 = vmatprep.subr.mxu0 0.0
    %1363 = vmatpush1.msra.mxu0 0.0
    %1364 = vmatprep.subr.mxu0 0.0
    %1365 = vmatpush1.msra.mxu0 0.0
    %1366 = vmatprep.mubr.f32.mxu0 0.0
    %1367 = vmatmul.mubr.f32.gmra.mrb[0].mxu0 %v1220
    %v1368 = vpop.f32.mrb[0].mxu0
    %v1369 = vadd.f32 %v1048, %v1368
    %v1370 = vpop.f32.mrb[0].mxu0
    %v1371 = vadd.f32 %v1048, %v1370
    %1372 = vmatprep.mubr.f32.mxu0 0.0
    %1373 = vmatmul.mubr.f32.gmra.mrb[0].mxu0 %v1223
    %v1374 = vpop.f32.mrb[0].mxu0
    %v1375 = vadd.f32 %v1053, %v1374
    %v1376 = vpop.f32.mrb[0].mxu0
    %v1377 = vadd.f32 %v1053, %v1376
    %1378 = vdwg.mxu0
    %v1379 = vmax.f32 %v1292, 0.0
    %v1380 = vmax.f32 %v1294, 0.0
    %v1381 = vmax.f32 %v1369, 0.0
    %v1382 = vmax.f32 %v1371, 0.0
    %v1383 = vmax.f32 %v1298, 0.0
    %v1384 = vmax.f32 %v1300, 0.0
    %v1385 = vmax.f32 %v1375, 0.0
    %v1386 = vmax.f32 %v1377, 0.0
    %v1387 = vld [vmem:[%s2] sm:$0xff]
    %v1389 = vcombine.high %v1387, %v1387
    %v1391 = vunpack.c.l.s4 1983009808
    %v1392 = vunpack.c.0.s8 %v1391
    %v1393 = vlaneseq
    %v1394 = vshrl.u32 %v1393, 7
    %v1395 = vsub.s32 %v1392, %v1394
    %v1396 = vrot.slane %v1387, %v1395
    %v1398 = vunpack.c.l.s4 1983009808
    %v1399 = vunpack.c.0.s8 %v1398
    %v1400 = vlaneseq
    %v1401 = vshrl.u32 %v1400, 7
    %v1402 = vsub.s32 %v1399, %v1401
    %v1403 = vrot.slane %v1389, %v1402
    %v1404 = vcombine.high %v1396, %v1396
    %v1405 = vcombine.high %v1403, %v1403
    %1410 = vmatprep.subr.mxu0 %v1380
    %1411 = vmatpush1.xpose.msra.mxu0 %v1379
    %1412 = vmatprep.subr.mxu0 %v1384
    %1413 = vmatpush1.xpose.msra.mxu0 %v1383
    %1414 = vmatprep.subr.mxu0 0.0
    %1415 = vmatpush1.xpose.msra.mxu0 0.0
    %1416 = vmatprep.subr.mxu0 0.0
    %1417 = vmatpush1.xpose.msra.mxu0 0.0
    %1418 = vmatprep.subr.mxu0 0.0
    %1419 = vmatpush1.xpose.msra.mxu0 0.0
    %1420 = vmatprep.subr.mxu0 0.0
    %1421 = vmatpush1.xpose.msra.mxu0 0.0
    %1422 = vmatprep.subr.mxu0 0.0
    %1423 = vmatpush1.xpose.msra.mxu0 0.0
    %1424 = vmatprep.subr.mxu0 0.0
    %1425 = vmatpush1.xpose.msra.mxu0 0.0
    %1426 = vmatprep.subr.mxu0 0.0
    %1427 = vmatpush1.xpose.msra.mxu0 0.0
    %1428 = vmatprep.subr.mxu0 0.0
    %1429 = vmatpush1.xpose.msra.mxu0 0.0
    %1430 = vmatprep.subr.mxu0 0.0
    %1431 = vmatpush1.xpose.msra.mxu0 0.0
    %1432 = vmatprep.subr.mxu0 0.0
    %1433 = vmatpush1.xpose.msra.mxu0 0.0
    %1434 = vmatprep.subr.mxu0 0.0
    %1435 = vmatpush1.xpose.msra.mxu0 0.0
    %1436 = vmatprep.subr.mxu0 0.0
    %1437 = vmatpush1.xpose.msra.mxu0 0.0
    %1438 = vmatprep.subr.mxu0 0.0
    %1439 = vmatpush1.xpose.msra.mxu0 0.0
    %1440 = vmatprep.subr.mxu0 0.0
    %1441 = vmatpush1.xpose.msra.mxu0 0.0
    %1442 = vmatprep.subr.mxu0 0.0
    %1443 = vmatpush1.xpose.msra.mxu0 0.0
    %1444 = vmatprep.subr.mxu0 0.0
    %1445 = vmatpush1.xpose.msra.mxu0 0.0
    %1446 = vmatprep.subr.mxu0 0.0
    %1447 = vmatpush1.xpose.msra.mxu0 0.0
    %1448 = vmatprep.subr.mxu0 0.0
    %1449 = vmatpush1.xpose.msra.mxu0 0.0
    %1450 = vmatprep.subr.mxu0 0.0
    %1451 = vmatpush1.xpose.msra.mxu0 0.0
    %1452 = vmatprep.subr.mxu0 0.0
    %1453 = vmatpush1.xpose.msra.mxu0 0.0
    %1454 = vmatprep.subr.mxu0 0.0
    %1455 = vmatpush1.xpose.msra.mxu0 0.0
    %1456 = vmatprep.subr.mxu0 0.0
    %1457 = vmatpush1.xpose.msra.mxu0 0.0
    %1458 = vmatprep.subr.mxu0 0.0
    %1459 = vmatpush1.xpose.msra.mxu0 0.0
    %1460 = vmatprep.subr.mxu0 0.0
    %1461 = vmatpush1.xpose.msra.mxu0 0.0
    %1462 = vmatprep.subr.mxu0 0.0
    %1463 = vmatpush1.xpose.msra.mxu0 0.0
    %1464 = vmatprep.subr.mxu0 0.0
    %1465 = vmatpush1.xpose.msra.mxu0 0.0
    %1466 = vmatprep.subr.mxu0 0.0
    %1467 = vmatpush1.xpose.msra.mxu0 0.0
    %1468 = vmatprep.subr.mxu0 0.0
    %1469 = vmatpush1.xpose.msra.mxu0 0.0
    %1470 = vmatprep.subr.mxu0 0.0
    %1471 = vmatpush1.xpose.msra.mxu0 0.0
    %1472 = vmatprep.subr.mxu0 0.0
    %1473 = vmatpush1.xpose.msra.mxu0 0.0
    %1474 = vmatprep.mubr.f32.mxu0 %v1404
    %1475 = vmatmul.mubr.f32.gmra.mrb[0].mxu0 %v1396
    %v1476 = vpop.f32.mrb[0].mxu0
    %v1477 = vadd.f32 0.0, %v1476
    %v1478 = vpop.f32.mrb[0].mxu0
    %1479 = vdwg.mxu0
    %1480 = vmatprep.subr.mxu0 %v1382
    %1481 = vmatpush1.xpose.msra.mxu0 %v1381
    %1482 = vmatprep.subr.mxu0 %v1386
    %1483 = vmatpush1.xpose.msra.mxu0 %v1385
    %1484 = vmatprep.subr.mxu0 0.0
    %1485 = vmatpush1.xpose.msra.mxu0 0.0
    %1486 = vmatprep.subr.mxu0 0.0
    %1487 = vmatpush1.xpose.msra.mxu0 0.0
    %1488 = vmatprep.subr.mxu0 0.0
    %1489 = vmatpush1.xpose.msra.mxu0 0.0
    %1490 = vmatprep.subr.mxu0 0.0
    %1491 = vmatpush1.xpose.msra.mxu0 0.0
    %1492 = vmatprep.subr.mxu0 0.0
    %1493 = vmatpush1.xpose.msra.mxu0 0.0
    %1494 = vmatprep.subr.mxu0 0.0
    %1495 = vmatpush1.xpose.msra.mxu0 0.0
    %1496 = vmatprep.subr.mxu0 0.0
    %1497 = vmatpush1.xpose.msra.mxu0 0.0
    %1498 = vmatprep.subr.mxu0 0.0
    %1499 = vmatpush1.xpose.msra.mxu0 0.0
    %1500 = vmatprep.subr.mxu0 0.0
    %1501 = vmatpush1.xpose.msra.mxu0 0.0
    %1502 = vmatprep.subr.mxu0 0.0
    %1503 = vmatpush1.xpose.msra.mxu0 0.0
    %1504 = vmatprep.subr.mxu0 0.0
    %1505 = vmatpush1.xpose.msra.mxu0 0.0
    %1506 = vmatprep.subr.mxu0 0.0
    %1507 = vmatpush1.xpose.msra.mxu0 0.0
    %1508 = vmatprep.subr.mxu0 0.0
    %1509 = vmatpush1.xpose.msra.mxu0 0.0
    %1510 = vmatprep.subr.mxu0 0.0
    %1511 = vmatpush1.xpose.msra.mxu0 0.0
    %1512 = vmatprep.subr.mxu0 0.0
    %1513 = vmatpush1.xpose.msra.mxu0 0.0
    %1514 = vmatprep.subr.mxu0 0.0
    %1515 = vmatpush1.xpose.msra.mxu0 0.0
    %1516 = vmatprep.subr.mxu0 0.0
    %1517 = vmatpush1.xpose.msra.mxu0 0.0
    %1518 = vmatprep.subr.mxu0 0.0
    %1519 = vmatpush1.xpose.msra.mxu0 0.0
    %1520 = vmatprep.subr.mxu0 0.0
    %1521 = vmatpush1.xpose.msra.mxu0 0.0
    %1522 = vmatprep.subr.mxu0 0.0
    %1523 = vmatpush1.xpose.msra.mxu0 0.0
    %1524 = vmatprep.subr.mxu0 0.0
    %1525 = vmatpush1.xpose.msra.mxu0 0.0
    %1526 = vmatprep.subr.mxu0 0.0
    %1527 = vmatpush1.xpose.msra.mxu0 0.0
    %1528 = vmatprep.subr.mxu0 0.0
    %1529 = vmatpush1.xpose.msra.mxu0 0.0
    %1530 = vmatprep.subr.mxu0 0.0
    %1531 = vmatpush1.xpose.msra.mxu0 0.0
    %1532 = vmatprep.subr.mxu0 0.0
    %1533 = vmatpush1.xpose.msra.mxu0 0.0
    %1534 = vmatprep.subr.mxu0 0.0
    %1535 = vmatpush1.xpose.msra.mxu0 0.0
    %1536 = vmatprep.subr.mxu0 0.0
    %1537 = vmatpush1.xpose.msra.mxu0 0.0
    %1538 = vmatprep.subr.mxu0 0.0
    %1539 = vmatpush1.xpose.msra.mxu0 0.0
    %1540 = vmatprep.subr.mxu0 0.0
    %1541 = vmatpush1.xpose.msra.mxu0 0.0
    %1542 = vmatprep.subr.mxu0 0.0
    %1543 = vmatpush1.xpose.msra.mxu0 0.0
    %1544 = vmatprep.mubr.f32.mxu0 %v1405
    %1545 = vmatmul.mubr.f32.gmra.mrb[0].mxu0 %v1403
    %v1546 = vpop.f32.mrb[0].mxu0
    %v1547 = vadd.f32 %v1477, %v1546
    %v1548 = vpop.f32.mrb[0].mxu0
    %1549 = vdwg.mxu0
    %v1550 = vld [vmem:[%s7] sm:$0xff]
    %v1551 = vld [vmem:[%s7 + $0x8] sm:$0xff]
    %v1552 = vld [vmem:[%s8] sm:$0x1]
    %v1554 = vlaneseq
    %v1555 = vshrl.u32 %v1554, 7
    %v1556 = vsub.s32 0, %v1555
    %v1557 = vrot.slane %v1552, %v1556
    %v1560 = vsel %vm347, %v1547, 0
    %1562 = vmatprep.subr.mxu0 0.0
    %1563 = vmatpush1.msra.mxu0 %v1550
    %1564 = vmatprep.subr.mxu0 0.0
    %1565 = vmatpush1.msra.mxu0 %v1551
    %1566 = vmatprep.subr.mxu0 0.0
    %1567 = vmatpush1.msra.mxu0 0.0
    %1568 = vmatprep.subr.mxu0 0.0
    %1569 = vmatpush1.msra.mxu0 0.0
    %1570 = vmatprep.subr.mxu0 0.0
    %1571 = vmatpush1.msra.mxu0 0.0
    %1572 = vmatprep.subr.mxu0 0.0
    %1573 = vmatpush1.msra.mxu0 0.0
    %1574 = vmatprep.subr.mxu0 0.0
    %1575 = vmatpush1.msra.mxu0 0.0
    %1576 = vmatprep.subr.mxu0 0.0
    %1577 = vmatpush1.msra.mxu0 0.0
    %1578 = vmatprep.subr.mxu0 0.0
    %1579 = vmatpush1.msra.mxu0 0.0
    %1580 = vmatprep.subr.mxu0 0.0
    %1581 = vmatpush1.msra.mxu0 0.0
    %1582 = vmatprep.subr.mxu0 0.0
    %1583 = vmatpush1.msra.mxu0 0.0
    %1584 = vmatprep.subr.mxu0 0.0
    %1585 = vmatpush1.msra.mxu0 0.0
    %1586 = vmatprep.subr.mxu0 0.0
    %1587 = vmatpush1.msra.mxu0 0.0
    %1588 = vmatprep.subr.mxu0 0.0
    %1589 = vmatpush1.msra.mxu0 0.0
    %1590 = vmatprep.subr.mxu0 0.0
    %1591 = vmatpush1.msra.mxu0 0.0
    %1592 = vmatprep.subr.mxu0 0.0
    %1593 = vmatpush1.msra.mxu0 0.0
    %1594 = vmatprep.subr.mxu0 0.0
    %1595 = vmatpush1.msra.mxu0 0.0
    %1596 = vmatprep.subr.mxu0 0.0
    %1597 = vmatpush1.msra.mxu0 0.0
    %1598 = vmatprep.subr.mxu0 0.0
    %1599 = vmatpush1.msra.mxu0 0.0
    %1600 = vmatprep.subr.mxu0 0.0
    %1601 = vmatpush1.msra.mxu0 0.0
    %1602 = vmatprep.subr.mxu0 0.0
    %1603 = vmatpush1.msra.mxu0 0.0
    %1604 = vmatprep.subr.mxu0 0.0
    %1605 = vmatpush1.msra.mxu0 0.0
    %1606 = vmatprep.subr.mxu0 0.0
    %1607 = vmatpush1.msra.mxu0 0.0
    %1608 = vmatprep.subr.mxu0 0.0
    %1609 = vmatpush1.msra.mxu0 0.0
    %1610 = vmatprep.subr.mxu0 0.0
    %1611 = vmatpush1.msra.mxu0 0.0
    %1612 = vmatprep.subr.mxu0 0.0
    %1613 = vmatpush1.msra.mxu0 0.0
    %1614 = vmatprep.subr.mxu0 0.0
    %1615 = vmatpush1.msra.mxu0 0.0
    %1616 = vmatprep.subr.mxu0 0.0
    %1617 = vmatpush1.msra.mxu0 0.0
    %1618 = vmatprep.subr.mxu0 0.0
    %1619 = vmatpush1.msra.mxu0 0.0
    %1620 = vmatprep.subr.mxu0 0.0
    %1621 = vmatpush1.msra.mxu0 0.0
    %1622 = vmatprep.subr.mxu0 0.0
    %1623 = vmatpush1.msra.mxu0 0.0
    %1624 = vmatprep.subr.mxu0 0.0
    %1625 = vmatpush1.msra.mxu0 0.0
    %1626 = vmatprep.mubr.f32.mxu0 0.0
    %1627 = vmatmul.mubr.f32.gmra.mrb[0].mxu0 %v1560
    %v1628 = vpop.f32.mrb[0].mxu0
    %v1629 = vadd.f32 %v1557, %v1628
    %v1630 = vpop.f32.mrb[0].mxu0
    %1631 = vdwg.mxu0
    %vm1632 = vcmask 254976
    %1633 = vst.msk [vmem:[#allocation2] sm:$0x3] %vm1632, %v1629
    // Predicated region
    $region38: #{encoder_forward.1} parent=1 // pred_check
      _
    $region39: #{encoder_forward.1} parent=1 // pred_check_branch
      %1635 = sbr.rel (0) target = $region41
    $region40: #{encoder_forward.1} parent=1 // pred_region
      %s1637 = ssub.s32 32, 32
      %1638 = vsyncadd [#allocation3], %s1637
      %s1640 = sshll.u32 [#allocation2], 4
      %s1641 = int_to_ptr.vmem [resolvable:$true] %s1640
      %1643 = dma.vmem_to_hbm [thread:$0]  %s1641, 32, %s9, [#allocation3]
    $region41: #{encoder_forward.1} parent=1 // pred_fallthru
      _
    // Predicated region
    $region42: #{encoder_forward.1} parent=1 // pred_check
      _
    $region43: #{encoder_forward.1} parent=1 // pred_check_branch
      %1645 = sbr.rel (0) target = $region45
    $region44: #{encoder_forward.1} parent=1 // pred_region
      %1646 = dma.done [#allocation3], 32
    $region45: #{encoder_forward.1} parent=1 // pred_fallthru
      _
    %1647 = vsyncpa [#allocation3], 1

</llo_original>
